<compile_context>
chip_gen: v7x
topology: tpu7x:2x2x1
jax: 0.10.0
libtpu: 0.0.40
codegen_flags: <defaults>
</compile_context>

<pallas_src>
import functools

import jax
import jax.numpy as jnp
from jax import lax
from jax.experimental import pallas as pl
from jax.experimental.pallas import tpu as pltpu

WORD_DIMS = 100
OUT_CHANNEL = 100
FILTER_SIZES = (2, 3, 4)
MAX_FS = max(FILTER_SIZES)
DROPOUT = 0.15                 # training-only in the torch module; eval path has no dropout

D_PAD = 128                                 # padded embedding dim (lanes)
C_PAD = 128                                 # padded out_channel per filter (lanes)
K_PAD = MAX_FS * D_PAD                      # 512 contraction rows (4 shifted emb copies)
OUT_COLS = len(FILTER_SIZES) * C_PAD        # 384 lane-dense output columns


def _round_up(x, m):
    return (x + m - 1) // m * m


def _cnn_kernel(emb_ref, w_ref, o_ref, *, l_true):
    # emb_ref: (TILE_N, L_PAD, D_PAD) bf16; lane WORD_DIMS holds the constant-1 bias lane.
    # w_ref:   (K_PAD, OUT_COLS)      bf16; row block k = tap-k weights of every filter,
    #          row WORD_DIMS of block 0 = the folded conv biases.
    # o_ref:   (TILE_N, OUT_COLS)     f32
    tile_n, l_pad, _ = emb_ref.shape
    emb = emb_ref[...]

    # Shifted-input packing: LHS block k holds emb shifted so row t sees emb[t + k].
    shifted = [emb] + [jnp.roll(emb, shift=-k, axis=1) for k in range(1, MAX_FS)]
    lhs = jnp.concatenate(shifted, axis=-1).reshape(tile_n * l_pad, K_PAD)

    # One MXU pass computes every filter's conv output (taps pre-summed in the packed
    # weights) with the bias already folded in via the constant-1 lane.
    y = jnp.dot(lhs, w_ref[...], preferred_element_type=jnp.float32)
    y = y.reshape(tile_n, l_pad, OUT_COLS)

    pos = lax.broadcasted_iota(jnp.int32, (1, l_pad, C_PAD), 1)
    for fs_idx, fs in enumerate(FILTER_SIZES):
        l_out = l_true - fs + 1                                  # static (L is trace-time)
        acc = jnp.maximum(y[:, :, fs_idx * C_PAD:(fs_idx + 1) * C_PAD], 0.0)   # ReLU
        # Positions t >= l_out hold roll-wrap / L-padding garbage; ReLU output is >= 0 and
        # at least one position is valid, so zeroing them keeps the max exact.
        acc = jnp.where(pos < l_out, acc, 0.0)
        # Direct 128-lane-aligned slab store (unmasked vst), no concat at the end.
        o_ref[:, fs_idx * C_PAD:(fs_idx + 1) * C_PAD] = jnp.max(acc, axis=1)


def _pack_weights(params):
    """Pack all conv weights + biases into one (K_PAD, OUT_COLS) bf16 slab.

    Rows [k*128, k*128+100) of filter fs's 128 output columns hold tap-k weights (zero for
    k >= fs); row 100 of block 0 holds the bias, which pairs with the constant-1 lane
    injected into the padded embeddings (bias folded into the matmul).
    """
    w = jnp.zeros((K_PAD, OUT_COLS), jnp.float32)
    for fs_idx, fs in enumerate(FILTER_SIZES):
        wt = params[f"conv{fs}_w"][:, 0]                          # torch layout (C, fs, D)
        col = fs_idx * C_PAD
        for k in range(fs):
            wk = jnp.transpose(wt[:, k, :], (1, 0))               # (D, C)
            w = w.at[k * D_PAD:k * D_PAD + WORD_DIMS, col:col + OUT_CHANNEL].set(wk)
        w = w.at[WORD_DIMS, col:col + OUT_CHANNEL].set(params[f"conv{fs}_b"])
    return w.astype(jnp.bfloat16)                                 # (512, 384)


def _choose_tile_n(n, l_pad, max_tile=128, budget_bytes=6 << 20):
    """Sentences per grid step: largest multiple of 8 whose per-step working set fits a
    conservative VMEM budget (v5e's 16 MiB default scoped limit is the tightest), capped so
    there are >= 2 grid steps when there is enough work (v7x has 2 TensorCores)."""
    # Dominant per-sentence live bytes: bf16 emb block (double-buffered) + 3 rolled bf16
    # copies + bf16 packed LHS + f32 matmul result + one f32 per-filter temp (+ f32 output).
    per_sent = l_pad * (2 * D_PAD * 2 + (MAX_FS - 1) * D_PAD * 2 + K_PAD * 2
                        + OUT_COLS * 4 + C_PAD * 4) + 2 * OUT_COLS * 4
    t = max(8, min(max_tile, budget_bytes // per_sent))
    t = (t // 8) * 8
    n8 = _round_up(n, 8)
    t = min(t, n8)
    if n8 >= 16:
        t = min(t, _round_up((n8 + 1) // 2, 8))   # guarantee >= 2 grid steps when possible
    return max(t, 8)


def word_cnn_encoder(word_ids, extword_ids, params, *, max_tile_n=128):
    """Forward pass of WordCNNEncoder (eval mode)."""
    # Embedding lookups + sum (glue, plain JAX gather).
    # TODO(synk): fuse the gather+sum into the kernel (scalar-prefetch ids + DMA row gather)
    # to avoid writing the (N, L, 128) activation stream to HBM only to read it straight
    # back; nn.Dropout(0.15) only runs when module.training, so the eval forward omits it.
    emb = params["word_embed"][word_ids] + params["extword_embed"][extword_ids]
    N, L, D = emb.shape
    assert D == WORD_DIMS
    assert L >= MAX_FS, "sent_len must be >= the largest filter size"

    l_pad = _round_up(L, 8)      # keep in-kernel reshapes sublane-aligned layout no-ops
    emb = jnp.pad(emb, ((0, 0), (0, l_pad - L), (0, D_PAD - D)))

    tile_n = _choose_tile_n(N, l_pad, max_tile_n)
    n_pad = _round_up(N, tile_n)
    if n_pad != N:
        emb = jnp.pad(emb, ((0, n_pad - N), (0, 0), (0, 0)))
    # Constant-1 lane, written AFTER all zero padding, that the packed bias row pairs with
    # (padded sentences just produce finite, discarded values).
    emb = emb.at[:, :, WORD_DIMS].set(1.0)
    emb = emb.astype(jnp.bfloat16)           # halves the HBM stream feeding the MXU

    w_packed = _pack_weights(params)

    out = pl.pallas_call(
        functools.partial(_cnn_kernel, l_true=L),
        grid=(n_pad // tile_n,),
        in_specs=[
            pl.BlockSpec((tile_n, l_pad, D_PAD), lambda i: (i, 0, 0)),
            pl.BlockSpec((K_PAD, OUT_COLS), lambda i: (0, 0)),     # resident weight slab
        ],
        out_specs=pl.BlockSpec((tile_n, OUT_COLS), lambda i: (i, 0)),
        out_shape=jax.ShapeDtypeStruct((n_pad, OUT_COLS), jnp.float32),
        compiler_params=pltpu.CompilerParams(
            dimension_semantics=("parallel",),
            vmem_limit_bytes=32 << 20,
        ),
    )(emb, w_packed)

    # Strip sentence padding and each filter's channel padding; keep torch concat order.
    pieces = [out[:N, i * C_PAD:i * C_PAD + OUT_CHANNEL] for i in range(len(FILTER_SIZES))]
    return jnp.concatenate(pieces, axis=1)                        # (N, 3*100)


def reference(word_ids, extword_ids, params):
    """Pure-JAX f32 reference mirroring the PyTorch forward, for verification."""
    emb = params["word_embed"][word_ids] + params["extword_embed"][extword_ids]
    N, L, D = emb.shape
    outs = []
    for fs in FILTER_SIZES:
        w = params[f"conv{fs}_w"][:, 0]                          # (C, fs, D)
        b = params[f"conv{fs}_b"]
        l_out = L - fs + 1
        conv = jnp.stack(
            [jnp.einsum("nkd,ckd->nc", emb[:, t:t + fs, :], w) for t in range(l_out)],
            axis=1) + b                                          # (N, l_out, C)
        outs.append(jnp.max(jax.nn.relu(conv), axis=1))
    return jnp.concatenate(outs, axis=1)


def init_params(key, vocab_size, extvocab_size):
    ks = jax.random.split(key, 2 + 2 * len(FILTER_SIZES))
    word_embed = 0.1 * jax.random.normal(ks[0], (vocab_size, WORD_DIMS), jnp.float32)
    word_embed = word_embed.at[0].set(0.0)                       # padding_idx=0
    ext_embed = 0.1 * jax.random.normal(ks[1], (extvocab_size, WORD_DIMS), jnp.float32)
    ext_embed = ext_embed.at[0].set(0.0)                         # padding_idx=0 (frozen pretrained)
    params = {"word_embed": word_embed, "extword_embed": ext_embed}
    for j, fs in enumerate(FILTER_SIZES):
        params[f"conv{fs}_w"] = 0.05 * jax.random.normal(
            ks[2 + 2 * j], (OUT_CHANNEL, 1, fs, WORD_DIMS), jnp.float32)
        params[f"conv{fs}_b"] = 0.01 * jax.random.normal(
            ks[3 + 2 * j], (OUT_CHANNEL,), jnp.float32)
    return params


if __name__ == "__main__":
    key = jax.random.PRNGKey(0)
    k_param, k_w, k_e = jax.random.split(key, 3)

    SEN_NUM, SENT_LEN = 4, 16
    VOCAB_SIZE, EXTVOCAB_SIZE = 50, 64

    params = init_params(k_param, VOCAB_SIZE, EXTVOCAB_SIZE)
    word_ids = jax.random.randint(k_w, (SEN_NUM, SENT_LEN), 0, VOCAB_SIZE, dtype=jnp.int32)
    extword_ids = jax.random.randint(k_e, (SEN_NUM, SENT_LEN), 0, EXTVOCAB_SIZE, dtype=jnp.int32)

    reps = word_cnn_encoder(word_ids, extword_ids, params)
    reps = jax.block_until_ready(reps)

    ref = jax.block_until_ready(reference(word_ids, extword_ids, params))
    assert reps.shape == (SEN_NUM, OUT_CHANNEL * len(FILTER_SIZES))
    # bf16 inputs/weights on the MXU (f32 accumulation) -> relaxed tolerance vs f32 reference.
    assert jnp.allclose(reps, ref, atol=1e-2, rtol=1e-2), \
        f"max abs err {jnp.max(jnp.abs(reps - ref))}"

    print("KERNEL_OK")
</pallas_src>

<mosaic_0001>
module attributes {stable_mosaic.version = 11 : i64} {
  func.func @_cnn_kernel(%arg0: i32, %arg1: memref<8x16x128xbf16, #tpu.memory_space<vmem>>, %arg2: memref<512x384xbf16, #tpu.memory_space<vmem>>, %arg3: memref<8x384xf32, #tpu.memory_space<vmem>>) attributes {dimension_semantics = [#tpu.dimension_semantics<parallel>], iteration_bounds = array<i64: 1>, scalar_prefetch = 0 : i64, scratch_operands = 0 : i64, tpu.core_type = #tpu.core_type<tc>, window_params = [{transform_indices = @transform_0, window_bounds = array<i64: 8, 16, 128>}, {pipeline_mode = #tpu.pipeline_mode<synchronous>, transform_indices = @transform_1, window_bounds = array<i64: 512, 384>}, {transform_indices = @transform_2, window_bounds = array<i64: 8, 384>}]} {
    %c0 = arith.constant 0 : index
    %c0_0 = arith.constant 0 : index
    %c0_1 = arith.constant 0 : index
    %0 = vector.load %arg1[%c0, %c0_0, %c0_1] : memref<8x16x128xbf16, #tpu.memory_space<vmem>>, vector<8x16x128xbf16>
    %1 = vector.extract_strided_slice %0 {offsets = [0, 1, 0], sizes = [8, 15, 128], strides = [1, 1, 1]} : vector<8x16x128xbf16> to vector<8x15x128xbf16>
    %2 = vector.extract_strided_slice %0 {offsets = [0, 0, 0], sizes = [8, 1, 128], strides = [1, 1, 1]} : vector<8x16x128xbf16> to vector<8x1x128xbf16>
    %3 = tpu.concatenate %1, %2 in 1 : vector<8x15x128xbf16>, vector<8x1x128xbf16> -> vector<8x16x128xbf16>
    %4 = vector.extract_strided_slice %0 {offsets = [0, 2, 0], sizes = [8, 14, 128], strides = [1, 1, 1]} : vector<8x16x128xbf16> to vector<8x14x128xbf16>
    %5 = vector.extract_strided_slice %0 {offsets = [0, 0, 0], sizes = [8, 2, 128], strides = [1, 1, 1]} : vector<8x16x128xbf16> to vector<8x2x128xbf16>
    %6 = tpu.concatenate %4, %5 in 1 : vector<8x14x128xbf16>, vector<8x2x128xbf16> -> vector<8x16x128xbf16>
    %7 = vector.extract_strided_slice %0 {offsets = [0, 3, 0], sizes = [8, 13, 128], strides = [1, 1, 1]} : vector<8x16x128xbf16> to vector<8x13x128xbf16>
    %8 = vector.extract_strided_slice %0 {offsets = [0, 0, 0], sizes = [8, 3, 128], strides = [1, 1, 1]} : vector<8x16x128xbf16> to vector<8x3x128xbf16>
    %9 = tpu.concatenate %7, %8 in 1 : vector<8x13x128xbf16>, vector<8x3x128xbf16> -> vector<8x16x128xbf16>
    %10 = tpu.concatenate %0, %3, %6, %9 in 2 : vector<8x16x128xbf16>, vector<8x16x128xbf16>, vector<8x16x128xbf16>, vector<8x16x128xbf16> -> vector<8x16x512xbf16>
    %11 = vector.shape_cast %10 : vector<8x16x512xbf16> to vector<128x512xbf16>
    %c0_2 = arith.constant 0 : index
    %c0_3 = arith.constant 0 : index
    %12 = vector.load %arg2[%c0_2, %c0_3] : memref<512x384xbf16, #tpu.memory_space<vmem>>, vector<512x384xbf16>
    %cst = arith.constant dense<0.000000e+00> : vector<128x384xf32>
    %13 = tpu.matmul %11, %12, %cst {dimension_numbers = #tpu.dot_dimension_numbers<[1], [0], [0], [1], [0, 0, 1, 1], [], []>} : vector<128x512xbf16>, vector<512x384xbf16>, vector<128x384xf32> -> vector<128x384xf32>
    %14 = vector.shape_cast %13 : vector<128x384xf32> to vector<8x16x384xf32>
    %15 = tpu.iota {dimensions = array<i32: 1>} : vector<1x16x128xi32>
    %16 = vector.extract_strided_slice %14 {offsets = [0, 0, 0], sizes = [8, 16, 128], strides = [1, 1, 1]} : vector<8x16x384xf32> to vector<8x16x128xf32>
    %cst_4 = arith.constant 0.000000e+00 : f32
    %17 = vector.broadcast %cst_4 : f32 to vector<8x16x128xf32>
    %18 = arith.maximumf %16, %17 : vector<8x16x128xf32>
    %c15_i32 = arith.constant 15 : i32
    %19 = vector.broadcast %c15_i32 : i32 to vector<1x16x128xi32>
    %20 = arith.cmpi slt, %15, %19 : vector<1x16x128xi32>
    %cst_5 = arith.constant 0.000000e+00 : f32
    %21 = vector.shape_cast %20 : vector<1x16x128xi1> to vector<1x16x128xi1>
    %22 = vector.broadcast %21 : vector<1x16x128xi1> to vector<8x16x128xi1>
    %23 = vector.broadcast %cst_5 : f32 to vector<8x16x128xf32>
    %24 = arith.select %22, %18, %23 : vector<8x16x128xi1>, vector<8x16x128xf32>
    %cst_6 = arith.constant dense<0xFF800000> : vector<8x128xf32>
    %25 = vector.multi_reduction <maximumf>, %24, %cst_6 [1] : vector<8x16x128xf32> to vector<8x128xf32>
    %c0_7 = arith.constant 0 : index
    %c0_8 = arith.constant 0 : index
    %26 = vector.load %arg3[%c0_7, %c0_8] : memref<8x384xf32, #tpu.memory_space<vmem>>, vector<8x128xf32>
    tpu.vector_store %arg3[%c0_7, %c0_8], %25 {strides = array<i32>} : memref<8x384xf32, #tpu.memory_space<vmem>>, vector<8x128xf32>,
    %27 = vector.extract_strided_slice %14 {offsets = [0, 0, 128], sizes = [8, 16, 128], strides = [1, 1, 1]} : vector<8x16x384xf32> to vector<8x16x128xf32>
    %cst_9 = arith.constant 0.000000e+00 : f32
    %28 = vector.broadcast %cst_9 : f32 to vector<8x16x128xf32>
    %29 = arith.maximumf %27, %28 : vector<8x16x128xf32>
    %c14_i32 = arith.constant 14 : i32
    %30 = vector.broadcast %c14_i32 : i32 to vector<1x16x128xi32>
    %31 = arith.cmpi slt, %15, %30 : vector<1x16x128xi32>
    %cst_10 = arith.constant 0.000000e+00 : f32
    %32 = vector.shape_cast %31 : vector<1x16x128xi1> to vector<1x16x128xi1>
    %33 = vector.broadcast %32 : vector<1x16x128xi1> to vector<8x16x128xi1>
    %34 = vector.broadcast %cst_10 : f32 to vector<8x16x128xf32>
    %35 = arith.select %33, %29, %34 : vector<8x16x128xi1>, vector<8x16x128xf32>
    %cst_11 = arith.constant dense<0xFF800000> : vector<8x128xf32>
    %36 = vector.multi_reduction <maximumf>, %35, %cst_11 [1] : vector<8x16x128xf32> to vector<8x128xf32>
    %c0_12 = arith.constant 0 : index
    %c128 = arith.constant 128 : index
    %37 = vector.load %arg3[%c0_12, %c128] : memref<8x384xf32, #tpu.memory_space<vmem>>, vector<8x128xf32>
    tpu.vector_store %arg3[%c0_12, %c128], %36 {strides = array<i32>} : memref<8x384xf32, #tpu.memory_space<vmem>>, vector<8x128xf32>,
    %38 = vector.extract_strided_slice %14 {offsets = [0, 0, 256], sizes = [8, 16, 128], strides = [1, 1, 1]} : vector<8x16x384xf32> to vector<8x16x128xf32>
    %cst_13 = arith.constant 0.000000e+00 : f32
    %39 = vector.broadcast %cst_13 : f32 to vector<8x16x128xf32>
    %40 = arith.maximumf %38, %39 : vector<8x16x128xf32>
    %c13_i32 = arith.constant 13 : i32
    %41 = vector.broadcast %c13_i32 : i32 to vector<1x16x128xi32>
    %42 = arith.cmpi slt, %15, %41 : vector<1x16x128xi32>
    %cst_14 = arith.constant 0.000000e+00 : f32
    %43 = vector.shape_cast %42 : vector<1x16x128xi1> to vector<1x16x128xi1>
    %44 = vector.broadcast %43 : vector<1x16x128xi1> to vector<8x16x128xi1>
    %45 = vector.broadcast %cst_14 : f32 to vector<8x16x128xf32>
    %46 = arith.select %44, %40, %45 : vector<8x16x128xi1>, vector<8x16x128xf32>
    %cst_15 = arith.constant dense<0xFF800000> : vector<8x128xf32>
    %47 = vector.multi_reduction <maximumf>, %46, %cst_15 [1] : vector<8x16x128xf32> to vector<8x128xf32>
    %c0_16 = arith.constant 0 : index
    %c256 = arith.constant 256 : index
    %48 = vector.load %arg3[%c0_16, %c256] : memref<8x384xf32, #tpu.memory_space<vmem>>, vector<8x128xf32>
    tpu.vector_store %arg3[%c0_16, %c256], %47 {strides = array<i32>} : memref<8x384xf32, #tpu.memory_space<vmem>>, vector<8x128xf32>,
    return
  }
  func.func @transform_0(%arg0: i32) -> (i32, i32, i32) {
    %c0_i32 = arith.constant 0 : i32
    %c0_i32_0 = arith.constant 0 : i32
    %c0_i32_1 = arith.constant 0 : i32
    return %arg0, %c0_i32, %c0_i32_0 : i32, i32, i32
  }
  func.func @transform_1(%arg0: i32) -> (i32, i32) {
    %c0_i32 = arith.constant 0 : i32
    %c0_i32_0 = arith.constant 0 : i32
    %c0_i32_1 = arith.constant 0 : i32
    return %c0_i32, %c0_i32_0 : i32, i32
  }
  func.func @transform_2(%arg0: i32) -> (i32, i32) {
    %c0_i32 = arith.constant 0 : i32
    %c0_i32_0 = arith.constant 0 : i32
    return %arg0, %c0_i32 : i32, i32
  }
}

</mosaic_0001>

<llo_original>
// kernel: tpu_custom_call.1
$region0: #{tpu_custom_call.1}
  #allocation0 [shape = 'u32[]', space=smem, size = 0x4, offset = 0x4, fixed_abs, tag = 'smem constant byte address 0x4 - core index']
  #allocation1 [shape = 'u32[144,128]{1,0:T(1,128)}', space=vmem, size = 0x12000, scoped, tag = 'internal scratch']
  %s0 = inlined_call_operand.hbm [shape: bf16[8,16,128], index: 0, kind: input, shape index: {}]
  %s1 = inlined_call_operand.hbm [shape: bf16[512,384], index: 1, kind: input, shape index: {}]
  %s2 = inlined_call_operand.hbm [shape: f32[8,384], index: 2, kind: output, shape index: {}]
  %s3 = sld [smem:[#allocation0]]
  $region26: #{tpu_custom_call.1} parent=0
    _
  %s5 = ssub.s32 1, %s3
  %s6 = scalar_select 0, %s5, %s3
  $region1: #{tpu_custom_call.1} parent=0
    #allocation2 [shape = 'u8[32768]{0}', space=vmem, size = 0x8000, scoped, tag = 'input window, operand 0, single buffered']
    #allocation3 [shape = 's32[1]{0}', space=sflag, size = 0x4, scoped, tag = 'scoped memory for tpu_custom_call.1']
    #allocation4 [shape = 's32[1]{0}', space=sflag, size = 0x4, scoped, tag = 'scoped memory for tpu_custom_call.1']
    #allocation5 [shape = 'u8[393216]{0}', space=vmem, size = 0x60000, scoped, tag = 'input window, operand 1, single buffered']
    #allocation6 [shape = 's32[1]{0}', space=sflag, size = 0x4, scoped, tag = 'scoped memory for tpu_custom_call.1']
    #allocation7 [shape = 'u8[12288]{0}', space=vmem, size = 0x3000, scoped, tag = 'output window, operand 0, single buffered']
    %7 = vsyncpa [#allocation3], 0
    %8 = vsyncpa [#allocation6], 0
    %9 = vsyncpa [#allocation4], 0
    // Predicated region
    $region2: #{tpu_custom_call.1} parent=1 // pred_check
      _
    $region3: #{tpu_custom_call.1} parent=1 // pred_check_branch
      %11 = sbr.rel (0) target = $region5
    $region4: #{tpu_custom_call.1} parent=1 // pred_region
      %s13 = ssub.s32 1024, 1024
      %14 = vsyncadd [#allocation3], %s13
      %s15 = sshll.u32 [#allocation2], 4
      %s16 = int_to_ptr.vmem [resolvable:$true] %s15
      %21 = dma.hbm_to_vmem [thread:$0]  %s0, 1024, %s16, [#allocation3], 64, 64, 4
    $region5: #{tpu_custom_call.1} parent=1 // pred_fallthru
      _
    // Predicated region
    $region6: #{tpu_custom_call.1} parent=1 // pred_check
      _
    $region7: #{tpu_custom_call.1} parent=1 // pred_check_branch
      %23 = sbr.rel (0) target = $region9
    $region8: #{tpu_custom_call.1} parent=1 // pred_region
      %s25 = ssub.s32 12288, 12288
      %26 = vsyncadd [#allocation6], %s25
      %s27 = sshll.u32 [#allocation5], 4
      %s28 = int_to_ptr.vmem [resolvable:$true] %s27
      %33 = dma.hbm_to_vmem [thread:$0]  %s1, 12288, %s28, [#allocation6], 192, 192, 12
    $region9: #{tpu_custom_call.1} parent=1 // pred_fallthru
      _
    // Predicated region
    $region10: #{tpu_custom_call.1} parent=1 // pred_check
      _
    $region11: #{tpu_custom_call.1} parent=1 // pred_check_branch
      %35 = sbr.rel (0) target = $region13
    $region12: #{tpu_custom_call.1} parent=1 // pred_region
      %36 = dma.done [#allocation3], 1024
    $region13: #{tpu_custom_call.1} parent=1 // pred_fallthru
      _
    // Predicated region
    $region14: #{tpu_custom_call.1} parent=1 // pred_check
      _
    $region15: #{tpu_custom_call.1} parent=1 // pred_check_branch
      %38 = sbr.rel (0) target = $region17
    $region16: #{tpu_custom_call.1} parent=1 // pred_region
      %39 = dma.done [#allocation6], 12288
    $region17: #{tpu_custom_call.1} parent=1 // pred_fallthru
      _
    %v41 = vld [vmem:[#allocation2] sm:$0xf]
    %v42 = vld [vmem:[#allocation2 + $0x4] sm:$0xf]
    %v43 = vld [vmem:[#allocation2 + $0x8] sm:$0xf]
    %v44 = vld [vmem:[#allocation2 + $0xc] sm:$0xf]
    %v45 = vld [vmem:[#allocation2 + $0x10] sm:$0xf]
    %v46 = vld [vmem:[#allocation2 + $0x14] sm:$0xf]
    %v47 = vld [vmem:[#allocation2 + $0x18] sm:$0xf]
    %v48 = vld [vmem:[#allocation2 + $0x1c] sm:$0xf]
    %v49 = vld [vmem:[#allocation2 + $0x20] sm:$0xf]
    %v50 = vld [vmem:[#allocation2 + $0x24] sm:$0xf]
    %v51 = vld [vmem:[#allocation2 + $0x28] sm:$0xf]
    %v52 = vld [vmem:[#allocation2 + $0x2c] sm:$0xf]
    %v53 = vld [vmem:[#allocation2 + $0x30] sm:$0xf]
    %v54 = vld [vmem:[#allocation2 + $0x34] sm:$0xf]
    %v55 = vld [vmem:[#allocation2 + $0x38] sm:$0xf]
    %v56 = vld [vmem:[#allocation2 + $0x3c] sm:$0xf]
    %v73 = vunpack.c.l.b16 %v41
    %v74 = vunpack.c.l.b16 %v42
    %v75 = vunpack.c.l.b16 %v43
    %v76 = vunpack.c.l.b16 %v44
    %v77 = vunpack.c.l.b16 %v45
    %v78 = vunpack.c.l.b16 %v46
    %v79 = vunpack.c.l.b16 %v47
    %v80 = vunpack.c.l.b16 %v48
    %v81 = vunpack.c.l.b16 %v49
    %v82 = vunpack.c.l.b16 %v50
    %v83 = vunpack.c.l.b16 %v51
    %v84 = vunpack.c.l.b16 %v52
    %v85 = vunpack.c.l.b16 %v53
    %v86 = vunpack.c.l.b16 %v54
    %v87 = vunpack.c.l.b16 %v55
    %v88 = vunpack.c.l.b16 %v56
    %v89 = vpack.c.b16 %v74, %v73
    %v90 = vpack.c.b16 %v76, %v75
    %v91 = vpack.c.b16 %v78, %v77
    %v92 = vpack.c.b16 %v80, %v79
    %v93 = vpack.c.b16 %v82, %v81
    %v94 = vpack.c.b16 %v84, %v83
    %v95 = vpack.c.b16 %v86, %v85
    %v96 = vpack.c.b16 %v88, %v87
    %v98 = vshrl.u32 %v89, 16
    %v100 = vshll.u32 %v89, 16
    %v102 = vrot.slane %v100, 1
    %v103 = vor.u32 %v98, %v102
    %v105 = vshrl.u32 %v90, 16
    %v107 = vshll.u32 %v90, 16
    %v109 = vrot.slane %v107, 1
    %v110 = vor.u32 %v105, %v109
    %v112 = vshrl.u32 %v91, 16
    %v114 = vshll.u32 %v91, 16
    %v116 = vrot.slane %v114, 1
    %v117 = vor.u32 %v112, %v116
    %v119 = vshrl.u32 %v92, 16
    %v121 = vshll.u32 %v92, 16
    %v123 = vrot.slane %v121, 1
    %v124 = vor.u32 %v119, %v123
    %v126 = vshrl.u32 %v93, 16
    %v128 = vshll.u32 %v93, 16
    %v130 = vrot.slane %v128, 1
    %v131 = vor.u32 %v126, %v130
    %v133 = vshrl.u32 %v94, 16
    %v135 = vshll.u32 %v94, 16
    %v137 = vrot.slane %v135, 1
    %v138 = vor.u32 %v133, %v137
    %v140 = vshrl.u32 %v95, 16
    %v142 = vshll.u32 %v95, 16
    %v144 = vrot.slane %v142, 1
    %v145 = vor.u32 %v140, %v144
    %v147 = vshrl.u32 %v96, 16
    %v149 = vshll.u32 %v96, 16
    %v151 = vrot.slane %v149, 1
    %v152 = vor.u32 %v147, %v151
    %v161 = vpack.c.b16 %v73, %v73
    %v162 = vpack.c.b16 %v75, %v75
    %v163 = vpack.c.b16 %v77, %v77
    %v164 = vpack.c.b16 %v79, %v79
    %v165 = vpack.c.b16 %v81, %v81
    %v166 = vpack.c.b16 %v83, %v83
    %v167 = vpack.c.b16 %v85, %v85
    %v168 = vpack.c.b16 %v87, %v87
    %v170 = vshll.u32 %v161, 16
    %v172 = vrot.slane %v170, 1
    %v174 = vshll.u32 %v162, 16
    %v176 = vrot.slane %v174, 1
    %v178 = vshll.u32 %v163, 16
    %v180 = vrot.slane %v178, 1
    %v182 = vshll.u32 %v164, 16
    %v184 = vrot.slane %v182, 1
    %v186 = vshll.u32 %v165, 16
    %v188 = vrot.slane %v186, 1
    %v190 = vshll.u32 %v166, 16
    %v192 = vrot.slane %v190, 1
    %v194 = vshll.u32 %v167, 16
    %v196 = vrot.slane %v194, 1
    %v198 = vshll.u32 %v168, 16
    %v200 = vrot.slane %v198, 1
    %vm209 = vcmask 1047552
    %vm210 = vsmask.f32 7424
    %vm211 = vmand %vm209, %vm210
    %v212 = vsel %vm211, %v103, %v172
    %v213 = vsel %vm211, %v110, %v176
    %v214 = vsel %vm211, %v117, %v180
    %v215 = vsel %vm211, %v124, %v184
    %v216 = vsel %vm211, %v131, %v188
    %v217 = vsel %vm211, %v138, %v192
    %v218 = vsel %vm211, %v145, %v196
    %v219 = vsel %vm211, %v152, %v200
    %v220 = vrot.slane %v89, 1
    %v221 = vrot.slane %v90, 1
    %v222 = vrot.slane %v91, 1
    %v223 = vrot.slane %v92, 1
    %v224 = vrot.slane %v93, 1
    %v225 = vrot.slane %v94, 1
    %v226 = vrot.slane %v95, 1
    %v227 = vrot.slane %v96, 1
    %v228 = vrot.slane %v161, 1
    %v229 = vrot.slane %v162, 1
    %v230 = vrot.slane %v163, 1
    %v231 = vrot.slane %v164, 1
    %v232 = vrot.slane %v165, 1
    %v233 = vrot.slane %v166, 1
    %v234 = vrot.slane %v167, 1
    %v235 = vrot.slane %v168, 1
    %vm236 = vcmask 1046528
    %v239 = vsel %vm236, %v220, %v228
    %v243 = vsel %vm236, %v221, %v229
    %v247 = vsel %vm236, %v222, %v230
    %v251 = vsel %vm236, %v223, %v231
    %v255 = vsel %vm236, %v224, %v232
    %v259 = vsel %vm236, %v225, %v233
    %v263 = vsel %vm236, %v226, %v234
    %v267 = vsel %vm236, %v227, %v235
    %v269 = vrot.slane %v98, 1
    %v270 = vrot.slane %v100, 2
    %v271 = vor.u32 %v269, %v270
    %v272 = vrot.slane %v105, 1
    %v273 = vrot.slane %v107, 2
    %v274 = vor.u32 %v272, %v273
    %v275 = vrot.slane %v112, 1
    %v276 = vrot.slane %v114, 2
    %v277 = vor.u32 %v275, %v276
    %v278 = vrot.slane %v119, 1
    %v279 = vrot.slane %v121, 2
    %v280 = vor.u32 %v278, %v279
    %v281 = vrot.slane %v126, 1
    %v282 = vrot.slane %v128, 2
    %v283 = vor.u32 %v281, %v282
    %v284 = vrot.slane %v133, 1
    %v285 = vrot.slane %v135, 2
    %v286 = vor.u32 %v284, %v285
    %v287 = vrot.slane %v140, 1
    %v288 = vrot.slane %v142, 2
    %v289 = vor.u32 %v287, %v288
    %v290 = vrot.slane %v147, 1
    %v291 = vrot.slane %v149, 2
    %v292 = vor.u32 %v290, %v291
    %v301 = vshrl.u32 %v161, 16
    %v303 = vrot.slane %v301, 1
    %v304 = vrot.slane %v170, 2
    %v305 = vor.u32 %v303, %v304
    %v306 = vshrl.u32 %v162, 16
    %v308 = vrot.slane %v306, 1
    %v309 = vrot.slane %v174, 2
    %v310 = vor.u32 %v308, %v309
    %v311 = vshrl.u32 %v163, 16
    %v313 = vrot.slane %v311, 1
    %v314 = vrot.slane %v178, 2
    %v315 = vor.u32 %v313, %v314
    %v316 = vshrl.u32 %v164, 16
    %v318 = vrot.slane %v316, 1
    %v319 = vrot.slane %v182, 2
    %v320 = vor.u32 %v318, %v319
    %v321 = vshrl.u32 %v165, 16
    %v323 = vrot.slane %v321, 1
    %v324 = vrot.slane %v186, 2
    %v325 = vor.u32 %v323, %v324
    %v326 = vshrl.u32 %v166, 16
    %v328 = vrot.slane %v326, 1
    %v329 = vrot.slane %v190, 2
    %v330 = vor.u32 %v328, %v329
    %v331 = vshrl.u32 %v167, 16
    %v333 = vrot.slane %v331, 1
    %v334 = vrot.slane %v194, 2
    %v335 = vor.u32 %v333, %v334
    %v336 = vshrl.u32 %v168, 16
    %v338 = vrot.slane %v336, 1
    %v339 = vrot.slane %v198, 2
    %v340 = vor.u32 %v338, %v339
    %vm349 = vcmask 1046528
    %vm350 = vsmask.f32 6400
    %vm351 = vmand %vm349, %vm350
    %v352 = vsel %vm351, %v271, %v305
    %v353 = vsel %vm351, %v274, %v310
    %v354 = vsel %vm351, %v277, %v315
    %v355 = vsel %vm351, %v280, %v320
    %v356 = vsel %vm351, %v283, %v325
    %v357 = vsel %vm351, %v286, %v330
    %v358 = vsel %vm351, %v289, %v335
    %v359 = vsel %vm351, %v292, %v340
    %v368 = vld [vmem:[#allocation5] sm:$0xff]
    %v369 = vld [vmem:[#allocation5 + $0x8] sm:$0xf]
    %v370 = vld [vmem:[#allocation5 + $0xc] sm:$0xff]
    %v371 = vld [vmem:[#allocation5 + $0x14] sm:$0xf]
    %v372 = vld [vmem:[#allocation5 + $0x18] sm:$0xff]
    %v373 = vld [vmem:[#allocation5 + $0x20] sm:$0xf]
    %v374 = vld [vmem:[#allocation5 + $0x24] sm:$0xff]
    %v375 = vld [vmem:[#allocation5 + $0x2c] sm:$0xf]
    %v376 = vld [vmem:[#allocation5 + $0x30] sm:$0xff]
    %v377 = vld [vmem:[#allocation5 + $0x38] sm:$0xf]
    %v378 = vld [vmem:[#allocation5 + $0x3c] sm:$0xff]
    %v379 = vld [vmem:[#allocation5 + $0x44] sm:$0xf]
    %v380 = vld [vmem:[#allocation5 + $0x48] sm:$0xff]
    %v381 = vld [vmem:[#allocation5 + $0x50] sm:$0xf]
    %v382 = vld [vmem:[#allocation5 + $0x54] sm:$0xff]
    %v383 = vld [vmem:[#allocation5 + $0x5c] sm:$0xf]
    %v384 = vld [vmem:[#allocation5 + $0x60] sm:$0xff]
    %v385 = vld [vmem:[#allocation5 + $0x68] sm:$0xf]
    %v386 = vld [vmem:[#allocation5 + $0x6c] sm:$0xff]
    %v387 = vld [vmem:[#allocation5 + $0x74] sm:$0xf]
    %v388 = vld [vmem:[#allocation5 + $0x78] sm:$0xff]
    %v389 = vld [vmem:[#allocation5 + $0x80] sm:$0xf]
    %v390 = vld [vmem:[#allocation5 + $0x84] sm:$0xff]
    %v391 = vld [vmem:[#allocation5 + $0x8c] sm:$0xf]
    %v392 = vld [vmem:[#allocation5 + $0x90] sm:$0xff]
    %v393 = vld [vmem:[#allocation5 + $0x98] sm:$0xf]
    %v394 = vld [vmem:[#allocation5 + $0x9c] sm:$0xff]
    %v395 = vld [vmem:[#allocation5 + $0xa4] sm:$0xf]
    %v396 = vld [vmem:[#allocation5 + $0xa8] sm:$0xff]
    %v397 = vld [vmem:[#allocation5 + $0xb0] sm:$0xf]
    %v398 = vld [vmem:[#allocation5 + $0xb4] sm:$0xff]
    %v399 = vld [vmem:[#allocation5 + $0xbc] sm:$0xf]
    %v400 = vld [vmem:[#allocation5 + $0xc0] sm:$0xff]
    %v401 = vld [vmem:[#allocation5 + $0xc8] sm:$0xf]
    %v402 = vld [vmem:[#allocation5 + $0xcc] sm:$0xff]
    %v403 = vld [vmem:[#allocation5 + $0xd4] sm:$0xf]
    %v404 = vld [vmem:[#allocation5 + $0xd8] sm:$0xff]
    %v405 = vld [vmem:[#allocation5 + $0xe0] sm:$0xf]
    %v406 = vld [vmem:[#allocation5 + $0xe4] sm:$0xff]
    %v407 = vld [vmem:[#allocation5 + $0xec] sm:$0xf]
    %v408 = vld [vmem:[#allocation5 + $0xf0] sm:$0xff]
    %v409 = vld [vmem:[#allocation5 + $0xf8] sm:$0xf]
    %v410 = vld [vmem:[#allocation5 + $0xfc] sm:$0xff]
    %v411 = vld [vmem:[#allocation5 + $0x104] sm:$0xf]
    %v412 = vld [vmem:[#allocation5 + $0x108] sm:$0xff]
    %v413 = vld [vmem:[#allocation5 + $0x110] sm:$0xf]
    %v414 = vld [vmem:[#allocation5 + $0x114] sm:$0xff]
    %v415 = vld [vmem:[#allocation5 + $0x11c] sm:$0xf]
    %v416 = vld [vmem:[#allocation5 + $0x120] sm:$0xff]
    %v417 = vld [vmem:[#allocation5 + $0x128] sm:$0xf]
    %v418 = vld [vmem:[#allocation5 + $0x12c] sm:$0xff]
    %v419 = vld [vmem:[#allocation5 + $0x134] sm:$0xf]
    %v420 = vld [vmem:[#allocation5 + $0x138] sm:$0xff]
    %v421 = vld [vmem:[#allocation5 + $0x140] sm:$0xf]
    %v422 = vld [vmem:[#allocation5 + $0x144] sm:$0xff]
    %v423 = vld [vmem:[#allocation5 + $0x14c] sm:$0xf]
    %v424 = vld [vmem:[#allocation5 + $0x150] sm:$0xff]
    %v425 = vld [vmem:[#allocation5 + $0x158] sm:$0xf]
    %v426 = vld [vmem:[#allocation5 + $0x15c] sm:$0xff]
    %v427 = vld [vmem:[#allocation5 + $0x164] sm:$0xf]
    %v428 = vld [vmem:[#allocation5 + $0x168] sm:$0xff]
    %v429 = vld [vmem:[#allocation5 + $0x170] sm:$0xf]
    %v430 = vld [vmem:[#allocation5 + $0x174] sm:$0xff]
    %v431 = vld [vmem:[#allocation5 + $0x17c] sm:$0xf]
    %v432 = vld [vmem:[#allocation5 + $0x180] sm:$0xff]
    %v433 = vld [vmem:[#allocation5 + $0x188] sm:$0xf]
    %v434 = vld [vmem:[#allocation5 + $0x18c] sm:$0xff]
    %v435 = vld [vmem:[#allocation5 + $0x194] sm:$0xf]
    %v436 = vld [vmem:[#allocation5 + $0x198] sm:$0xff]
    %v437 = vld [vmem:[#allocation5 + $0x1a0] sm:$0xf]
    %v438 = vld [vmem:[#allocation5 + $0x1a4] sm:$0xff]
    %v439 = vld [vmem:[#allocation5 + $0x1ac] sm:$0xf]
    %v440 = vld [vmem:[#allocation5 + $0x1b0] sm:$0xff]
    %v441 = vld [vmem:[#allocation5 + $0x1b8] sm:$0xf]
    %v442 = vld [vmem:[#allocation5 + $0x1bc] sm:$0xff]
    %v443 = vld [vmem:[#allocation5 + $0x1c4] sm:$0xf]
    %v444 = vld [vmem:[#allocation5 + $0x1c8] sm:$0xff]
    %v445 = vld [vmem:[#allocation5 + $0x1d0] sm:$0xf]
    %v446 = vld [vmem:[#allocation5 + $0x1d4] sm:$0xff]
    %v447 = vld [vmem:[#allocation5 + $0x1dc] sm:$0xf]
    %v448 = vld [vmem:[#allocation5 + $0x1e0] sm:$0xff]
    %v449 = vld [vmem:[#allocation5 + $0x1e8] sm:$0xf]
    %v450 = vld [vmem:[#allocation5 + $0x1ec] sm:$0xff]
    %v451 = vld [vmem:[#allocation5 + $0x1f4] sm:$0xf]
    %v452 = vld [vmem:[#allocation5 + $0x1f8] sm:$0xff]
    %v453 = vld [vmem:[#allocation5 + $0x200] sm:$0xf]
    %v454 = vld [vmem:[#allocation5 + $0x204] sm:$0xff]
    %v455 = vld [vmem:[#allocation5 + $0x20c] sm:$0xf]
    %v456 = vld [vmem:[#allocation5 + $0x210] sm:$0xff]
    %v457 = vld [vmem:[#allocation5 + $0x218] sm:$0xf]
    %v458 = vld [vmem:[#allocation5 + $0x21c] sm:$0xff]
    %v459 = vld [vmem:[#allocation5 + $0x224] sm:$0xf]
    %v460 = vld [vmem:[#allocation5 + $0x228] sm:$0xff]
    %v461 = vld [vmem:[#allocation5 + $0x230] sm:$0xf]
    %v462 = vld [vmem:[#allocation5 + $0x234] sm:$0xff]
    %v463 = vld [vmem:[#allocation5 + $0x23c] sm:$0xf]
    %v464 = vld [vmem:[#allocation5 + $0x240] sm:$0xff]
    %v465 = vld [vmem:[#allocation5 + $0x248] sm:$0xf]
    %v466 = vld [vmem:[#allocation5 + $0x24c] sm:$0xff]
    %v467 = vld [vmem:[#allocation5 + $0x254] sm:$0xf]
    %v468 = vld [vmem:[#allocation5 + $0x258] sm:$0xff]
    %v469 = vld [vmem:[#allocation5 + $0x260] sm:$0xf]
    %v470 = vld [vmem:[#allocation5 + $0x264] sm:$0xff]
    %v471 = vld [vmem:[#allocation5 + $0x26c] sm:$0xf]
    %v472 = vld [vmem:[#allocation5 + $0x270] sm:$0xff]
    %v473 = vld [vmem:[#allocation5 + $0x278] sm:$0xf]
    %v474 = vld [vmem:[#allocation5 + $0x27c] sm:$0xff]
    %v475 = vld [vmem:[#allocation5 + $0x284] sm:$0xf]
    %v476 = vld [vmem:[#allocation5 + $0x288] sm:$0xff]
    %v477 = vld [vmem:[#allocation5 + $0x290] sm:$0xf]
    %v478 = vld [vmem:[#allocation5 + $0x294] sm:$0xff]
    %v479 = vld [vmem:[#allocation5 + $0x29c] sm:$0xf]
    %v480 = vld [vmem:[#allocation5 + $0x2a0] sm:$0xff]
    %v481 = vld [vmem:[#allocation5 + $0x2a8] sm:$0xf]
    %v482 = vld [vmem:[#allocation5 + $0x2ac] sm:$0xff]
    %v483 = vld [vmem:[#allocation5 + $0x2b4] sm:$0xf]
    %v484 = vld [vmem:[#allocation5 + $0x2b8] sm:$0xff]
    %v485 = vld [vmem:[#allocation5 + $0x2c0] sm:$0xf]
    %v486 = vld [vmem:[#allocation5 + $0x2c4] sm:$0xff]
    %v487 = vld [vmem:[#allocation5 + $0x2cc] sm:$0xf]
    %v488 = vld [vmem:[#allocation5 + $0x2d0] sm:$0xff]
    %v489 = vld [vmem:[#allocation5 + $0x2d8] sm:$0xf]
    %v490 = vld [vmem:[#allocation5 + $0x2dc] sm:$0xff]
    %v491 = vld [vmem:[#allocation5 + $0x2e4] sm:$0xf]
    %v492 = vld [vmem:[#allocation5 + $0x2e8] sm:$0xff]
    %v493 = vld [vmem:[#allocation5 + $0x2f0] sm:$0xf]
    %v494 = vld [vmem:[#allocation5 + $0x2f4] sm:$0xff]
    %v495 = vld [vmem:[#allocation5 + $0x2fc] sm:$0xf]
    %v624 = vunpack.c.l.b16 %v368
    %v625 = vunpack.c.h.b16 %v368
    %v626 = vunpack.c.l.b16 %v369
    %v627 = vunpack.c.l.b16 %v370
    %v628 = vunpack.c.h.b16 %v370
    %v629 = vunpack.c.l.b16 %v371
    %v630 = vunpack.c.l.b16 %v372
    %v631 = vunpack.c.h.b16 %v372
    %v632 = vunpack.c.l.b16 %v373
    %v633 = vunpack.c.l.b16 %v374
    %v634 = vunpack.c.h.b16 %v374
    %v635 = vunpack.c.l.b16 %v375
    %v636 = vunpack.c.l.b16 %v376
    %v637 = vunpack.c.h.b16 %v376
    %v638 = vunpack.c.l.b16 %v377
    %v639 = vunpack.c.l.b16 %v378
    %v640 = vunpack.c.h.b16 %v378
    %v641 = vunpack.c.l.b16 %v379
    %v642 = vunpack.c.l.b16 %v380
    %v643 = vunpack.c.h.b16 %v380
    %v644 = vunpack.c.l.b16 %v381
    %v645 = vunpack.c.l.b16 %v382
    %v646 = vunpack.c.h.b16 %v382
    %v647 = vunpack.c.l.b16 %v383
    %v648 = vunpack.c.l.b16 %v384
    %v649 = vunpack.c.h.b16 %v384
    %v650 = vunpack.c.l.b16 %v385
    %v651 = vunpack.c.l.b16 %v386
    %v652 = vunpack.c.h.b16 %v386
    %v653 = vunpack.c.l.b16 %v387
    %v654 = vunpack.c.l.b16 %v388
    %v655 = vunpack.c.h.b16 %v388
    %v656 = vunpack.c.l.b16 %v389
    %v657 = vunpack.c.l.b16 %v390
    %v658 = vunpack.c.h.b16 %v390
    %v659 = vunpack.c.l.b16 %v391
    %v660 = vunpack.c.l.b16 %v392
    %v661 = vunpack.c.h.b16 %v392
    %v662 = vunpack.c.l.b16 %v393
    %v663 = vunpack.c.l.b16 %v394
    %v664 = vunpack.c.h.b16 %v394
    %v665 = vunpack.c.l.b16 %v395
    %v666 = vunpack.c.l.b16 %v396
    %v667 = vunpack.c.h.b16 %v396
    %v668 = vunpack.c.l.b16 %v397
    %v669 = vunpack.c.l.b16 %v398
    %v670 = vunpack.c.h.b16 %v398
    %v671 = vunpack.c.l.b16 %v399
    %v672 = vunpack.c.l.b16 %v400
    %v673 = vunpack.c.h.b16 %v400
    %v674 = vunpack.c.l.b16 %v401
    %v675 = vunpack.c.l.b16 %v402
    %v676 = vunpack.c.h.b16 %v402
    %v677 = vunpack.c.l.b16 %v403
    %v678 = vunpack.c.l.b16 %v404
    %v679 = vunpack.c.h.b16 %v404
    %v680 = vunpack.c.l.b16 %v405
    %v681 = vunpack.c.l.b16 %v406
    %v682 = vunpack.c.h.b16 %v406
    %v683 = vunpack.c.l.b16 %v407
    %v684 = vunpack.c.l.b16 %v408
    %v685 = vunpack.c.h.b16 %v408
    %v686 = vunpack.c.l.b16 %v409
    %v687 = vunpack.c.l.b16 %v410
    %v688 = vunpack.c.h.b16 %v410
    %v689 = vunpack.c.l.b16 %v411
    %v690 = vunpack.c.l.b16 %v412
    %v691 = vunpack.c.h.b16 %v412
    %v692 = vunpack.c.l.b16 %v413
    %v693 = vunpack.c.l.b16 %v414
    %v694 = vunpack.c.h.b16 %v414
    %v695 = vunpack.c.l.b16 %v415
    %v696 = vunpack.c.l.b16 %v416
    %v697 = vunpack.c.h.b16 %v416
    %v698 = vunpack.c.l.b16 %v417
    %v699 = vunpack.c.l.b16 %v418
    %v700 = vunpack.c.h.b16 %v418
    %v701 = vunpack.c.l.b16 %v419
    %v702 = vunpack.c.l.b16 %v420
    %v703 = vunpack.c.h.b16 %v420
    %v704 = vunpack.c.l.b16 %v421
    %v705 = vunpack.c.l.b16 %v422
    %v706 = vunpack.c.h.b16 %v422
    %v707 = vunpack.c.l.b16 %v423
    %v708 = vunpack.c.l.b16 %v424
    %v709 = vunpack.c.h.b16 %v424
    %v710 = vunpack.c.l.b16 %v425
    %v711 = vunpack.c.l.b16 %v426
    %v712 = vunpack.c.h.b16 %v426
    %v713 = vunpack.c.l.b16 %v427
    %v714 = vunpack.c.l.b16 %v428
    %v715 = vunpack.c.h.b16 %v428
    %v716 = vunpack.c.l.b16 %v429
    %v717 = vunpack.c.l.b16 %v430
    %v718 = vunpack.c.h.b16 %v430
    %v719 = vunpack.c.l.b16 %v431
    %v720 = vunpack.c.l.b16 %v432
    %v721 = vunpack.c.h.b16 %v432
    %v722 = vunpack.c.l.b16 %v433
    %v723 = vunpack.c.l.b16 %v434
    %v724 = vunpack.c.h.b16 %v434
    %v725 = vunpack.c.l.b16 %v435
    %v726 = vunpack.c.l.b16 %v436
    %v727 = vunpack.c.h.b16 %v436
    %v728 = vunpack.c.l.b16 %v437
    %v729 = vunpack.c.l.b16 %v438
    %v730 = vunpack.c.h.b16 %v438
    %v731 = vunpack.c.l.b16 %v439
    %v732 = vunpack.c.l.b16 %v440
    %v733 = vunpack.c.h.b16 %v440
    %v734 = vunpack.c.l.b16 %v441
    %v735 = vunpack.c.l.b16 %v442
    %v736 = vunpack.c.h.b16 %v442
    %v737 = vunpack.c.l.b16 %v443
    %v738 = vunpack.c.l.b16 %v444
    %v739 = vunpack.c.h.b16 %v444
    %v740 = vunpack.c.l.b16 %v445
    %v741 = vunpack.c.l.b16 %v446
    %v742 = vunpack.c.h.b16 %v446
    %v743 = vunpack.c.l.b16 %v447
    %v744 = vunpack.c.l.b16 %v448
    %v745 = vunpack.c.h.b16 %v448
    %v746 = vunpack.c.l.b16 %v449
    %v747 = vunpack.c.l.b16 %v450
    %v748 = vunpack.c.h.b16 %v450
    %v749 = vunpack.c.l.b16 %v451
    %v750 = vunpack.c.l.b16 %v452
    %v751 = vunpack.c.h.b16 %v452
    %v752 = vunpack.c.l.b16 %v453
    %v753 = vunpack.c.l.b16 %v454
    %v754 = vunpack.c.h.b16 %v454
    %v755 = vunpack.c.l.b16 %v455
    %v756 = vunpack.c.l.b16 %v456
    %v757 = vunpack.c.h.b16 %v456
    %v758 = vunpack.c.l.b16 %v457
    %v759 = vunpack.c.l.b16 %v458
    %v760 = vunpack.c.h.b16 %v458
    %v761 = vunpack.c.l.b16 %v459
    %v762 = vunpack.c.l.b16 %v460
    %v763 = vunpack.c.h.b16 %v460
    %v764 = vunpack.c.l.b16 %v461
    %v765 = vunpack.c.l.b16 %v462
    %v766 = vunpack.c.h.b16 %v462
    %v767 = vunpack.c.l.b16 %v463
    %v768 = vunpack.c.l.b16 %v464
    %v769 = vunpack.c.h.b16 %v464
    %v770 = vunpack.c.l.b16 %v465
    %v771 = vunpack.c.l.b16 %v466
    %v772 = vunpack.c.h.b16 %v466
    %v773 = vunpack.c.l.b16 %v467
    %v774 = vunpack.c.l.b16 %v468
    %v775 = vunpack.c.h.b16 %v468
    %v776 = vunpack.c.l.b16 %v469
    %v777 = vunpack.c.l.b16 %v470
    %v778 = vunpack.c.h.b16 %v470
    %v779 = vunpack.c.l.b16 %v471
    %v780 = vunpack.c.l.b16 %v472
    %v781 = vunpack.c.h.b16 %v472
    %v782 = vunpack.c.l.b16 %v473
    %v783 = vunpack.c.l.b16 %v474
    %v784 = vunpack.c.h.b16 %v474
    %v785 = vunpack.c.l.b16 %v475
    %v786 = vunpack.c.l.b16 %v476
    %v787 = vunpack.c.h.b16 %v476
    %v788 = vunpack.c.l.b16 %v477
    %v789 = vunpack.c.l.b16 %v478
    %v790 = vunpack.c.h.b16 %v478
    %v791 = vunpack.c.l.b16 %v479
    %v792 = vunpack.c.l.b16 %v480
    %v793 = vunpack.c.h.b16 %v480
    %v794 = vunpack.c.l.b16 %v481
    %v795 = vunpack.c.l.b16 %v482
    %v796 = vunpack.c.h.b16 %v482
    %v797 = vunpack.c.l.b16 %v483
    %v798 = vunpack.c.l.b16 %v484
    %v799 = vunpack.c.h.b16 %v484
    %v800 = vunpack.c.l.b16 %v485
    %v801 = vunpack.c.l.b16 %v486
    %v802 = vunpack.c.h.b16 %v486
    %v803 = vunpack.c.l.b16 %v487
    %v804 = vunpack.c.l.b16 %v488
    %v805 = vunpack.c.h.b16 %v488
    %v806 = vunpack.c.l.b16 %v489
    %v807 = vunpack.c.l.b16 %v490
    %v808 = vunpack.c.h.b16 %v490
    %v809 = vunpack.c.l.b16 %v491
    %v810 = vunpack.c.l.b16 %v492
    %v811 = vunpack.c.h.b16 %v492
    %v812 = vunpack.c.l.b16 %v493
    %v813 = vunpack.c.l.b16 %v494
    %v814 = vunpack.c.h.b16 %v494
    %v815 = vunpack.c.l.b16 %v495
    %v816 = vpack.c.b16 %v627, %v624
    %v817 = vpack.c.b16 %v628, %v625
    %v818 = vpack.c.b16 %v629, %v626
    %v819 = vpack.c.b16 %v633, %v630
    %v820 = vpack.c.b16 %v634, %v631
    %v821 = vpack.c.b16 %v635, %v632
    %v822 = vpack.c.b16 %v639, %v636
    %v823 = vpack.c.b16 %v640, %v637
    %v824 = vpack.c.b16 %v641, %v638
    %v825 = vpack.c.b16 %v645, %v642
    %v826 = vpack.c.b16 %v646, %v643
    %v827 = vpack.c.b16 %v647, %v644
    %v828 = vpack.c.b16 %v651, %v648
    %v829 = vpack.c.b16 %v652, %v649
    %v830 = vpack.c.b16 %v653, %v650
    %v831 = vpack.c.b16 %v657, %v654
    %v832 = vpack.c.b16 %v658, %v655
    %v833 = vpack.c.b16 %v659, %v656
    %v834 = vpack.c.b16 %v663, %v660
    %v835 = vpack.c.b16 %v664, %v661
    %v836 = vpack.c.b16 %v665, %v662
    %v837 = vpack.c.b16 %v669, %v666
    %v838 = vpack.c.b16 %v670, %v667
    %v839 = vpack.c.b16 %v671, %v668
    %v840 = vpack.c.b16 %v675, %v672
    %v841 = vpack.c.b16 %v676, %v673
    %v842 = vpack.c.b16 %v677, %v674
    %v843 = vpack.c.b16 %v681, %v678
    %v844 = vpack.c.b16 %v682, %v679
    %v845 = vpack.c.b16 %v683, %v680
    %v846 = vpack.c.b16 %v687, %v684
    %v847 = vpack.c.b16 %v688, %v685
    %v848 = vpack.c.b16 %v689, %v686
    %v849 = vpack.c.b16 %v693, %v690
    %v850 = vpack.c.b16 %v694, %v691
    %v851 = vpack.c.b16 %v695, %v692
    %v852 = vpack.c.b16 %v699, %v696
    %v853 = vpack.c.b16 %v700, %v697
    %v854 = vpack.c.b16 %v701, %v698
    %v855 = vpack.c.b16 %v705, %v702
    %v856 = vpack.c.b16 %v706, %v703
    %v857 = vpack.c.b16 %v707, %v704
    %v858 = vpack.c.b16 %v711, %v708
    %v859 = vpack.c.b16 %v712, %v709
    %v860 = vpack.c.b16 %v713, %v710
    %v861 = vpack.c.b16 %v717, %v714
    %v862 = vpack.c.b16 %v718, %v715
    %v863 = vpack.c.b16 %v719, %v716
    %v864 = vpack.c.b16 %v723, %v720
    %v865 = vpack.c.b16 %v724, %v721
    %v866 = vpack.c.b16 %v725, %v722
    %v867 = vpack.c.b16 %v729, %v726
    %v868 = vpack.c.b16 %v730, %v727
    %v869 = vpack.c.b16 %v731, %v728
    %v870 = vpack.c.b16 %v735, %v732
    %v871 = vpack.c.b16 %v736, %v733
    %v872 = vpack.c.b16 %v737, %v734
    %v873 = vpack.c.b16 %v741, %v738
    %v874 = vpack.c.b16 %v742, %v739
    %v875 = vpack.c.b16 %v743, %v740
    %v876 = vpack.c.b16 %v747, %v744
    %v877 = vpack.c.b16 %v748, %v745
    %v878 = vpack.c.b16 %v749, %v746
    %v879 = vpack.c.b16 %v753, %v750
    %v880 = vpack.c.b16 %v754, %v751
    %v881 = vpack.c.b16 %v755, %v752
    %v882 = vpack.c.b16 %v759, %v756
    %v883 = vpack.c.b16 %v760, %v757
    %v884 = vpack.c.b16 %v761, %v758
    %v885 = vpack.c.b16 %v765, %v762
    %v886 = vpack.c.b16 %v766, %v763
    %v887 = vpack.c.b16 %v767, %v764
    %v888 = vpack.c.b16 %v771, %v768
    %v889 = vpack.c.b16 %v772, %v769
    %v890 = vpack.c.b16 %v773, %v770
    %v891 = vpack.c.b16 %v777, %v774
    %v892 = vpack.c.b16 %v778, %v775
    %v893 = vpack.c.b16 %v779, %v776
    %v894 = vpack.c.b16 %v783, %v780
    %v895 = vpack.c.b16 %v784, %v781
    %v896 = vpack.c.b16 %v785, %v782
    %v897 = vpack.c.b16 %v789, %v786
    %v898 = vpack.c.b16 %v790, %v787
    %v899 = vpack.c.b16 %v791, %v788
    %v900 = vpack.c.b16 %v795, %v792
    %v901 = vpack.c.b16 %v796, %v793
    %v902 = vpack.c.b16 %v797, %v794
    %v903 = vpack.c.b16 %v801, %v798
    %v904 = vpack.c.b16 %v802, %v799
    %v905 = vpack.c.b16 %v803, %v800
    %v906 = vpack.c.b16 %v807, %v804
    %v907 = vpack.c.b16 %v808, %v805
    %v908 = vpack.c.b16 %v809, %v806
    %v909 = vpack.c.b16 %v813, %v810
    %v910 = vpack.c.b16 %v814, %v811
    %v911 = vpack.c.b16 %v815, %v812
    %1008 = vmatprep.subr.bf16.mxu0 %v817
    %1009 = vmatpush1.bf16.msra.mxu0 %v816
    %1010 = vmatprep.subr.bf16.mxu0 %v820
    %1011 = vmatpush1.bf16.msra.mxu0 %v819
    %1012 = vmatprep.subr.bf16.mxu0 %v823
    %1013 = vmatpush1.bf16.msra.mxu0 %v822
    %1014 = vmatprep.subr.bf16.mxu0 %v826
    %1015 = vmatpush1.bf16.msra.mxu0 %v825
    %1016 = vmatprep.subr.bf16.mxu0 %v829
    %1017 = vmatpush1.bf16.msra.mxu0 %v828
    %1018 = vmatprep.subr.bf16.mxu0 %v832
    %1019 = vmatpush1.bf16.msra.mxu0 %v831
    %1020 = vmatprep.subr.bf16.mxu0 %v835
    %1021 = vmatpush1.bf16.msra.mxu0 %v834
    %1022 = vmatprep.subr.bf16.mxu0 %v838
    %1023 = vmatpush1.bf16.msra.mxu0 %v837
    %1024 = vmatprep.subr.bf16.mxu0 %v841
    %1025 = vmatpush1.bf16.msra.mxu0 %v840
    %1026 = vmatprep.subr.bf16.mxu0 %v844
    %1027 = vmatpush1.bf16.msra.mxu0 %v843
    %1028 = vmatprep.subr.bf16.mxu0 %v847
    %1029 = vmatpush1.bf16.msra.mxu0 %v846
    %1030 = vmatprep.subr.bf16.mxu0 %v850
    %1031 = vmatpush1.bf16.msra.mxu0 %v849
    %1032 = vmatprep.subr.bf16.mxu0 %v853
    %1033 = vmatpush1.bf16.msra.mxu0 %v852
    %1034 = vmatprep.subr.bf16.mxu0 %v856
    %1035 = vmatpush1.bf16.msra.mxu0 %v855
    %1036 = vmatprep.subr.bf16.mxu0 %v859
    %1037 = vmatpush1.bf16.msra.mxu0 %v858
    %1038 = vmatprep.subr.bf16.mxu0 %v862
    %1039 = vmatpush1.bf16.msra.mxu0 %v861
    %1040 = vmatprep.mubr.bf16.mxu0 %v212
    %1041 = vmatmul.mubr.bf16.gmra.mrb[0].mxu0 %v89
    %v1042 = vpop.f32.mrb[0].mxu0
    %v1043 = vadd.f32 0.0, %v1042
    %v1044 = vpop.f32.mrb[0].mxu0
    %v1045 = vadd.f32 0.0, %v1044
    %v1046 = vpop.f32.mrb[0].mxu0
    %v1047 = vadd.f32 0.0, %v1046
    %v1048 = vpop.f32.mrb[0].mxu0
    %v1049 = vadd.f32 0.0, %v1048
    %1050 = vmatprep.mubr.bf16.mxu0 %v213
    %1051 = vmatmul.mubr.bf16.gmra.mrb[0].mxu0 %v90
    %v1052 = vpop.f32.mrb[0].mxu0
    %v1053 = vadd.f32 0.0, %v1052
    %v1054 = vpop.f32.mrb[0].mxu0
    %v1055 = vadd.f32 0.0, %v1054
    %v1056 = vpop.f32.mrb[0].mxu0
    %v1057 = vadd.f32 0.0, %v1056
    %v1058 = vpop.f32.mrb[0].mxu0
    %v1059 = vadd.f32 0.0, %v1058
    %1060 = vmatprep.mubr.bf16.mxu0 %v214
    %1061 = vmatmul.mubr.bf16.gmra.mrb[0].mxu0 %v91
    %v1062 = vpop.f32.mrb[0].mxu0
    %v1063 = vadd.f32 0.0, %v1062
    %v1064 = vpop.f32.mrb[0].mxu0
    %v1065 = vadd.f32 0.0, %v1064
    %v1066 = vpop.f32.mrb[0].mxu0
    %v1067 = vadd.f32 0.0, %v1066
    %v1068 = vpop.f32.mrb[0].mxu0
    %v1069 = vadd.f32 0.0, %v1068
    %1070 = vmatprep.mubr.bf16.mxu0 %v215
    %1071 = vmatmul.mubr.bf16.gmra.mrb[0].mxu0 %v92
    %v1072 = vpop.f32.mrb[0].mxu0
    %v1073 = vadd.f32 0.0, %v1072
    %v1074 = vpop.f32.mrb[0].mxu0
    %v1075 = vadd.f32 0.0, %v1074
    %v1076 = vpop.f32.mrb[0].mxu0
    %v1077 = vadd.f32 0.0, %v1076
    %v1078 = vpop.f32.mrb[0].mxu0
    %v1079 = vadd.f32 0.0, %v1078
    %1080 = vmatprep.mubr.bf16.mxu0 %v216
    %1081 = vmatmul.mubr.bf16.gmra.mrb[0].mxu0 %v93
    %v1082 = vpop.f32.mrb[0].mxu0
    %v1083 = vadd.f32 0.0, %v1082
    %v1084 = vpop.f32.mrb[0].mxu0
    %v1085 = vadd.f32 0.0, %v1084
    %v1086 = vpop.f32.mrb[0].mxu0
    %v1087 = vadd.f32 0.0, %v1086
    %v1088 = vpop.f32.mrb[0].mxu0
    %v1089 = vadd.f32 0.0, %v1088
    %1090 = vmatprep.mubr.bf16.mxu0 %v217
    %1091 = vmatmul.mubr.bf16.gmra.mrb[0].mxu0 %v94
    %v1092 = vpop.f32.mrb[0].mxu0
    %v1093 = vadd.f32 0.0, %v1092
    %v1094 = vpop.f32.mrb[0].mxu0
    %v1095 = vadd.f32 0.0, %v1094
    %v1096 = vpop.f32.mrb[0].mxu0
    %v1097 = vadd.f32 0.0, %v1096
    %v1098 = vpop.f32.mrb[0].mxu0
    %v1099 = vadd.f32 0.0, %v1098
    %1100 = vmatprep.mubr.bf16.mxu0 %v218
    %1101 = vmatmul.mubr.bf16.gmra.mrb[0].mxu0 %v95
    %v1102 = vpop.f32.mrb[0].mxu0
    %v1103 = vadd.f32 0.0, %v1102
    %v1104 = vpop.f32.mrb[0].mxu0
    %v1105 = vadd.f32 0.0, %v1104
    %v1106 = vpop.f32.mrb[0].mxu0
    %v1107 = vadd.f32 0.0, %v1106
    %v1108 = vpop.f32.mrb[0].mxu0
    %v1109 = vadd.f32 0.0, %v1108
    %1110 = vmatprep.mubr.bf16.mxu0 %v219
    %1111 = vmatmul.mubr.bf16.gmra.mrb[0].mxu0 %v96
    %v1112 = vpop.f32.mrb[0].mxu0
    %v1113 = vadd.f32 0.0, %v1112
    %v1114 = vpop.f32.mrb[0].mxu0
    %v1115 = vadd.f32 0.0, %v1114
    %v1116 = vpop.f32.mrb[0].mxu0
    %v1117 = vadd.f32 0.0, %v1116
    %v1118 = vpop.f32.mrb[0].mxu0
    %v1119 = vadd.f32 0.0, %v1118
    %1120 = vdwg.mxu0
    %1121 = vmatprep.subr.bf16.mxu0 %v865
    %1122 = vmatpush1.bf16.msra.mxu0 %v864
    %1123 = vmatprep.subr.bf16.mxu0 %v868
    %1124 = vmatpush1.bf16.msra.mxu0 %v867
    %1125 = vmatprep.subr.bf16.mxu0 %v871
    %1126 = vmatpush1.bf16.msra.mxu0 %v870
    %1127 = vmatprep.subr.bf16.mxu0 %v874
    %1128 = vmatpush1.bf16.msra.mxu0 %v873
    %1129 = vmatprep.subr.bf16.mxu0 %v877
    %1130 = vmatpush1.bf16.msra.mxu0 %v876
    %1131 = vmatprep.subr.bf16.mxu0 %v880
    %1132 = vmatpush1.bf16.msra.mxu0 %v879
    %1133 = vmatprep.subr.bf16.mxu0 %v883
    %1134 = vmatpush1.bf16.msra.mxu0 %v882
    %1135 = vmatprep.subr.bf16.mxu0 %v886
    %1136 = vmatpush1.bf16.msra.mxu0 %v885
    %1137 = vmatprep.subr.bf16.mxu0 %v889
    %1138 = vmatpush1.bf16.msra.mxu0 %v888
    %1139 = vmatprep.subr.bf16.mxu0 %v892
    %1140 = vmatpush1.bf16.msra.mxu0 %v891
    %1141 = vmatprep.subr.bf16.mxu0 %v895
    %1142 = vmatpush1.bf16.msra.mxu0 %v894
    %1143 = vmatprep.subr.bf16.mxu0 %v898
    %1144 = vmatpush1.bf16.msra.mxu0 %v897
    %1145 = vmatprep.subr.bf16.mxu0 %v901
    %1146 = vmatpush1.bf16.msra.mxu0 %v900
    %1147 = vmatprep.subr.bf16.mxu0 %v904
    %1148 = vmatpush1.bf16.msra.mxu0 %v903
    %1149 = vmatprep.subr.bf16.mxu0 %v907
    %1150 = vmatpush1.bf16.msra.mxu0 %v906
    %1151 = vmatprep.subr.bf16.mxu0 %v910
    %1152 = vmatpush1.bf16.msra.mxu0 %v909
    %1153 = vmatprep.mubr.bf16.mxu0 %v352
    %1154 = vmatmul.mubr.bf16.gmra.mrb[0].mxu0 %v239
    %v1155 = vpop.f32.mrb[0].mxu0
    %v1156 = vadd.f32 %v1043, %v1155
    %v1157 = vpop.f32.mrb[0].mxu0
    %v1158 = vadd.f32 %v1045, %v1157
    %v1159 = vpop.f32.mrb[0].mxu0
    %v1160 = vadd.f32 %v1047, %v1159
    %v1161 = vpop.f32.mrb[0].mxu0
    %v1162 = vadd.f32 %v1049, %v1161
    %1163 = vmatprep.mubr.bf16.mxu0 %v353
    %1164 = vmatmul.mubr.bf16.gmra.mrb[0].mxu0 %v243
    %v1165 = vpop.f32.mrb[0].mxu0
    %v1166 = vadd.f32 %v1053, %v1165
    %v1167 = vpop.f32.mrb[0].mxu0
    %v1168 = vadd.f32 %v1055, %v1167
    %v1169 = vpop.f32.mrb[0].mxu0
    %v1170 = vadd.f32 %v1057, %v1169
    %v1171 = vpop.f32.mrb[0].mxu0
    %v1172 = vadd.f32 %v1059, %v1171
    %1173 = vmatprep.mubr.bf16.mxu0 %v354
    %1174 = vmatmul.mubr.bf16.gmra.mrb[0].mxu0 %v247
    %v1175 = vpop.f32.mrb[0].mxu0
    %v1176 = vadd.f32 %v1063, %v1175
    %v1177 = vpop.f32.mrb[0].mxu0
    %v1178 = vadd.f32 %v1065, %v1177
    %v1179 = vpop.f32.mrb[0].mxu0
    %v1180 = vadd.f32 %v1067, %v1179
    %v1181 = vpop.f32.mrb[0].mxu0
    %v1182 = vadd.f32 %v1069, %v1181
    %1183 = vmatprep.mubr.bf16.mxu0 %v355
    %1184 = vmatmul.mubr.bf16.gmra.mrb[0].mxu0 %v251
    %v1185 = vpop.f32.mrb[0].mxu0
    %v1186 = vadd.f32 %v1073, %v1185
    %v1187 = vpop.f32.mrb[0].mxu0
    %v1188 = vadd.f32 %v1075, %v1187
    %v1189 = vpop.f32.mrb[0].mxu0
    %v1190 = vadd.f32 %v1077, %v1189
    %v1191 = vpop.f32.mrb[0].mxu0
    %v1192 = vadd.f32 %v1079, %v1191
    %1193 = vmatprep.mubr.bf16.mxu0 %v356
    %1194 = vmatmul.mubr.bf16.gmra.mrb[0].mxu0 %v255
    %v1195 = vpop.f32.mrb[0].mxu0
    %v1196 = vadd.f32 %v1083, %v1195
    %v1197 = vpop.f32.mrb[0].mxu0
    %v1198 = vadd.f32 %v1085, %v1197
    %v1199 = vpop.f32.mrb[0].mxu0
    %v1200 = vadd.f32 %v1087, %v1199
    %v1201 = vpop.f32.mrb[0].mxu0
    %v1202 = vadd.f32 %v1089, %v1201
    %1203 = vmatprep.mubr.bf16.mxu0 %v357
    %1204 = vmatmul.mubr.bf16.gmra.mrb[0].mxu0 %v259
    %v1205 = vpop.f32.mrb[0].mxu0
    %v1206 = vadd.f32 %v1093, %v1205
    %v1207 = vpop.f32.mrb[0].mxu0
    %v1208 = vadd.f32 %v1095, %v1207
    %v1209 = vpop.f32.mrb[0].mxu0
    %v1210 = vadd.f32 %v1097, %v1209
    %v1211 = vpop.f32.mrb[0].mxu0
    %v1212 = vadd.f32 %v1099, %v1211
    %1213 = vmatprep.mubr.bf16.mxu0 %v358
    %1214 = vmatmul.mubr.bf16.gmra.mrb[0].mxu0 %v263
    %v1215 = vpop.f32.mrb[0].mxu0
    %v1216 = vadd.f32 %v1103, %v1215
    %v1217 = vpop.f32.mrb[0].mxu0
    %v1218 = vadd.f32 %v1105, %v1217
    %v1219 = vpop.f32.mrb[0].mxu0
    %v1220 = vadd.f32 %v1107, %v1219
    %v1221 = vpop.f32.mrb[0].mxu0
    %v1222 = vadd.f32 %v1109, %v1221
    %1223 = vmatprep.mubr.bf16.mxu0 %v359
    %1224 = vmatmul.mubr.bf16.gmra.mrb[0].mxu0 %v267
    %v1225 = vpop.f32.mrb[0].mxu0
    %v1226 = vadd.f32 %v1113, %v1225
    %v1227 = vpop.f32.mrb[0].mxu0
    %v1228 = vadd.f32 %v1115, %v1227
    %v1229 = vpop.f32.mrb[0].mxu0
    %v1230 = vadd.f32 %v1117, %v1229
    %v1231 = vpop.f32.mrb[0].mxu0
    %v1232 = vadd.f32 %v1119, %v1231
    %1233 = vdwg.mxu0
    %1234 = vmatprep.subr.bf16.mxu0 0
    %1235 = vmatpush1.bf16.msra.mxu0 %v818
    %1236 = vmatprep.subr.bf16.mxu0 0
    %1237 = vmatpush1.bf16.msra.mxu0 %v821
    %1238 = vmatprep.subr.bf16.mxu0 0
    %1239 = vmatpush1.bf16.msra.mxu0 %v824
    %1240 = vmatprep.subr.bf16.mxu0 0
    %1241 = vmatpush1.bf16.msra.mxu0 %v827
    %1242 = vmatprep.subr.bf16.mxu0 0
    %1243 = vmatpush1.bf16.msra.mxu0 %v830
    %1244 = vmatprep.subr.bf16.mxu0 0
    %1245 = vmatpush1.bf16.msra.mxu0 %v833
    %1246 = vmatprep.subr.bf16.mxu0 0
    %1247 = vmatpush1.bf16.msra.mxu0 %v836
    %1248 = vmatprep.subr.bf16.mxu0 0
    %1249 = vmatpush1.bf16.msra.mxu0 %v839
    %1250 = vmatprep.subr.bf16.mxu0 0
    %1251 = vmatpush1.bf16.msra.mxu0 %v842
    %1252 = vmatprep.subr.bf16.mxu0 0
    %1253 = vmatpush1.bf16.msra.mxu0 %v845
    %1254 = vmatprep.subr.bf16.mxu0 0
    %1255 = vmatpush1.bf16.msra.mxu0 %v848
    %1256 = vmatprep.subr.bf16.mxu0 0
    %1257 = vmatpush1.bf16.msra.mxu0 %v851
    %1258 = vmatprep.subr.bf16.mxu0 0
    %1259 = vmatpush1.bf16.msra.mxu0 %v854
    %1260 = vmatprep.subr.bf16.mxu0 0
    %1261 = vmatpush1.bf16.msra.mxu0 %v857
    %1262 = vmatprep.subr.bf16.mxu0 0
    %1263 = vmatpush1.bf16.msra.mxu0 %v860
    %1264 = vmatprep.subr.bf16.mxu0 0
    %1265 = vmatpush1.bf16.msra.mxu0 %v863
    %1266 = vmatprep.mubr.bf16.mxu0 %v212
    %1267 = vmatmul.mubr.bf16.gmra.mrb[0].mxu0 %v89
    %v1268 = vpop.f32.mrb[0].mxu0
    %v1269 = vadd.f32 0.0, %v1268
    %v1270 = vpop.f32.mrb[0].mxu0
    %v1271 = vpop.f32.mrb[0].mxu0
    %v1272 = vadd.f32 0.0, %v1271
    %v1273 = vpop.f32.mrb[0].mxu0
    %1274 = vmatprep.mubr.bf16.mxu0 %v213
    %1275 = vmatmul.mubr.bf16.gmra.mrb[0].mxu0 %v90
    %v1276 = vpop.f32.mrb[0].mxu0
    %v1277 = vadd.f32 0.0, %v1276
    %v1278 = vpop.f32.mrb[0].mxu0
    %v1279 = vpop.f32.mrb[0].mxu0
    %v1280 = vadd.f32 0.0, %v1279
    %v1281 = vpop.f32.mrb[0].mxu0
    %1282 = vmatprep.mubr.bf16.mxu0 %v214
    %1283 = vmatmul.mubr.bf16.gmra.mrb[0].mxu0 %v91
    %v1284 = vpop.f32.mrb[0].mxu0
    %v1285 = vadd.f32 0.0, %v1284
    %v1286 = vpop.f32.mrb[0].mxu0
    %v1287 = vpop.f32.mrb[0].mxu0
    %v1288 = vadd.f32 0.0, %v1287
    %v1289 = vpop.f32.mrb[0].mxu0
    %1290 = vmatprep.mubr.bf16.mxu0 %v215
    %1291 = vmatmul.mubr.bf16.gmra.mrb[0].mxu0 %v92
    %v1292 = vpop.f32.mrb[0].mxu0
    %v1293 = vadd.f32 0.0, %v1292
    %v1294 = vpop.f32.mrb[0].mxu0
    %v1295 = vpop.f32.mrb[0].mxu0
    %v1296 = vadd.f32 0.0, %v1295
    %v1297 = vpop.f32.mrb[0].mxu0
    %1298 = vmatprep.mubr.bf16.mxu0 %v216
    %1299 = vmatmul.mubr.bf16.gmra.mrb[0].mxu0 %v93
    %v1300 = vpop.f32.mrb[0].mxu0
    %v1301 = vadd.f32 0.0, %v1300
    %v1302 = vpop.f32.mrb[0].mxu0
    %v1303 = vpop.f32.mrb[0].mxu0
    %v1304 = vadd.f32 0.0, %v1303
    %v1305 = vpop.f32.mrb[0].mxu0
    %1306 = vmatprep.mubr.bf16.mxu0 %v217
    %1307 = vmatmul.mubr.bf16.gmra.mrb[0].mxu0 %v94
    %v1308 = vpop.f32.mrb[0].mxu0
    %v1309 = vadd.f32 0.0, %v1308
    %v1310 = vpop.f32.mrb[0].mxu0
    %v1311 = vpop.f32.mrb[0].mxu0
    %v1312 = vadd.f32 0.0, %v1311
    %v1313 = vpop.f32.mrb[0].mxu0
    %1314 = vmatprep.mubr.bf16.mxu0 %v218
    %1315 = vmatmul.mubr.bf16.gmra.mrb[0].mxu0 %v95
    %v1316 = vpop.f32.mrb[0].mxu0
    %v1317 = vadd.f32 0.0, %v1316
    %v1318 = vpop.f32.mrb[0].mxu0
    %v1319 = vpop.f32.mrb[0].mxu0
    %v1320 = vadd.f32 0.0, %v1319
    %v1321 = vpop.f32.mrb[0].mxu0
    %1322 = vmatprep.mubr.bf16.mxu0 %v219
    %1323 = vmatmul.mubr.bf16.gmra.mrb[0].mxu0 %v96
    %v1324 = vpop.f32.mrb[0].mxu0
    %v1325 = vadd.f32 0.0, %v1324
    %v1326 = vpop.f32.mrb[0].mxu0
    %v1327 = vpop.f32.mrb[0].mxu0
    %v1328 = vadd.f32 0.0, %v1327
    %v1329 = vpop.f32.mrb[0].mxu0
    %1330 = vdwg.mxu0
    %1331 = vmatprep.subr.bf16.mxu0 0
    %1332 = vmatpush1.bf16.msra.mxu0 %v866
    %1333 = vmatprep.subr.bf16.mxu0 0
    %1334 = vmatpush1.bf16.msra.mxu0 %v869
    %1335 = vmatprep.subr.bf16.mxu0 0
    %1336 = vmatpush1.bf16.msra.mxu0 %v872
    %1337 = vmatprep.subr.bf16.mxu0 0
    %1338 = vmatpush1.bf16.msra.mxu0 %v875
    %1339 = vmatprep.subr.bf16.mxu0 0
    %1340 = vmatpush1.bf16.msra.mxu0 %v878
    %1341 = vmatprep.subr.bf16.mxu0 0
    %1342 = vmatpush1.bf16.msra.mxu0 %v881
    %1343 = vmatprep.subr.bf16.mxu0 0
    %1344 = vmatpush1.bf16.msra.mxu0 %v884
    %1345 = vmatprep.subr.bf16.mxu0 0
    %1346 = vmatpush1.bf16.msra.mxu0 %v887
    %1347 = vmatprep.subr.bf16.mxu0 0
    %1348 = vmatpush1.bf16.msra.mxu0 %v890
    %1349 = vmatprep.subr.bf16.mxu0 0
    %1350 = vmatpush1.bf16.msra.mxu0 %v893
    %1351 = vmatprep.subr.bf16.mxu0 0
    %1352 = vmatpush1.bf16.msra.mxu0 %v896
    %1353 = vmatprep.subr.bf16.mxu0 0
    %1354 = vmatpush1.bf16.msra.mxu0 %v899
    %1355 = vmatprep.subr.bf16.mxu0 0
    %1356 = vmatpush1.bf16.msra.mxu0 %v902
    %1357 = vmatprep.subr.bf16.mxu0 0
    %1358 = vmatpush1.bf16.msra.mxu0 %v905
    %1359 = vmatprep.subr.bf16.mxu0 0
    %1360 = vmatpush1.bf16.msra.mxu0 %v908
    %1361 = vmatprep.subr.bf16.mxu0 0
    %1362 = vmatpush1.bf16.msra.mxu0 %v911
    %1363 = vmatprep.mubr.bf16.mxu0 %v352
    %1364 = vmatmul.mubr.bf16.gmra.mrb[0].mxu0 %v239
    %v1365 = vpop.f32.mrb[0].mxu0
    %v1366 = vadd.f32 %v1269, %v1365
    %v1367 = vpop.f32.mrb[0].mxu0
    %v1368 = vpop.f32.mrb[0].mxu0
    %v1369 = vadd.f32 %v1272, %v1368
    %v1370 = vpop.f32.mrb[0].mxu0
    %1371 = vmatprep.mubr.bf16.mxu0 %v353
    %1372 = vmatmul.mubr.bf16.gmra.mrb[0].mxu0 %v243
    %v1373 = vpop.f32.mrb[0].mxu0
    %v1374 = vadd.f32 %v1277, %v1373
    %v1375 = vpop.f32.mrb[0].mxu0
    %v1376 = vpop.f32.mrb[0].mxu0
    %v1377 = vadd.f32 %v1280, %v1376
    %v1378 = vpop.f32.mrb[0].mxu0
    %1379 = vmatprep.mubr.bf16.mxu0 %v354
    %1380 = vmatmul.mubr.bf16.gmra.mrb[0].mxu0 %v247
    %v1381 = vpop.f32.mrb[0].mxu0
    %v1382 = vadd.f32 %v1285, %v1381
    %v1383 = vpop.f32.mrb[0].mxu0
    %v1384 = vpop.f32.mrb[0].mxu0
    %v1385 = vadd.f32 %v1288, %v1384
    %v1386 = vpop.f32.mrb[0].mxu0
    %1387 = vmatprep.mubr.bf16.mxu0 %v355
    %1388 = vmatmul.mubr.bf16.gmra.mrb[0].mxu0 %v251
    %v1389 = vpop.f32.mrb[0].mxu0
    %v1390 = vadd.f32 %v1293, %v1389
    %v1391 = vpop.f32.mrb[0].mxu0
    %v1392 = vpop.f32.mrb[0].mxu0
    %v1393 = vadd.f32 %v1296, %v1392
    %v1394 = vpop.f32.mrb[0].mxu0
    %1395 = vmatprep.mubr.bf16.mxu0 %v356
    %1396 = vmatmul.mubr.bf16.gmra.mrb[0].mxu0 %v255
    %v1397 = vpop.f32.mrb[0].mxu0
    %v1398 = vadd.f32 %v1301, %v1397
    %v1399 = vpop.f32.mrb[0].mxu0
    %v1400 = vpop.f32.mrb[0].mxu0
    %v1401 = vadd.f32 %v1304, %v1400
    %v1402 = vpop.f32.mrb[0].mxu0
    %1403 = vmatprep.mubr.bf16.mxu0 %v357
    %1404 = vmatmul.mubr.bf16.gmra.mrb[0].mxu0 %v259
    %v1405 = vpop.f32.mrb[0].mxu0
    %v1406 = vadd.f32 %v1309, %v1405
    %v1407 = vpop.f32.mrb[0].mxu0
    %v1408 = vpop.f32.mrb[0].mxu0
    %v1409 = vadd.f32 %v1312, %v1408
    %v1410 = vpop.f32.mrb[0].mxu0
    %1411 = vmatprep.mubr.bf16.mxu0 %v358
    %1412 = vmatmul.mubr.bf16.gmra.mrb[0].mxu0 %v263
    %v1413 = vpop.f32.mrb[0].mxu0
    %v1414 = vadd.f32 %v1317, %v1413
    %v1415 = vpop.f32.mrb[0].mxu0
    %v1416 = vpop.f32.mrb[0].mxu0
    %v1417 = vadd.f32 %v1320, %v1416
    %v1418 = vpop.f32.mrb[0].mxu0
    %1419 = vmatprep.mubr.bf16.mxu0 %v359
    %1420 = vmatmul.mubr.bf16.gmra.mrb[0].mxu0 %v267
    %v1421 = vpop.f32.mrb[0].mxu0
    %v1422 = vadd.f32 %v1325, %v1421
    %v1423 = vpop.f32.mrb[0].mxu0
    %v1424 = vpop.f32.mrb[0].mxu0
    %v1425 = vadd.f32 %v1328, %v1424
    %v1426 = vpop.f32.mrb[0].mxu0
    %1427 = vdwg.mxu0
    %v1428 = vlaneseq
    %v1429 = vshrl.u32 %v1428, 7
    %v1430 = vadd.s32 %v1429, 8
    %v1431 = vmax.f32 %v1156, 0.0
    %v1432 = vmax.f32 %v1160, 0.0
    %v1433 = vmax.f32 %v1166, 0.0
    %v1434 = vmax.f32 %v1170, 0.0
    %v1435 = vmax.f32 %v1176, 0.0
    %v1436 = vmax.f32 %v1180, 0.0
    %v1437 = vmax.f32 %v1186, 0.0
    %v1438 = vmax.f32 %v1190, 0.0
    %v1439 = vmax.f32 %v1196, 0.0
    %v1440 = vmax.f32 %v1200, 0.0
    %v1441 = vmax.f32 %v1206, 0.0
    %v1442 = vmax.f32 %v1210, 0.0
    %v1443 = vmax.f32 %v1216, 0.0
    %v1444 = vmax.f32 %v1220, 0.0
    %v1445 = vmax.f32 %v1226, 0.0
    %v1446 = vmax.f32 %v1230, 0.0
    %vm1447 = vcmp.lt.s32.totalorder %v1429, 15
    %vm1448 = vcmp.lt.s32.totalorder %v1430, 15
    %v1449 = vsel %vm1447, 1, 0
    %v1450 = vsel %vm1448, 1, 0
    %vm1451 = vcmp.eq.s32.totalorder %v1449, 1
    %vm1452 = vcmp.eq.s32.totalorder %v1450, 1
    %v1453 = vsel %vm1451, %v1431, 0.0
    %v1454 = vsel %vm1452, %v1432, 0.0
    %v1455 = vsel %vm1451, %v1433, 0.0
    %v1456 = vsel %vm1452, %v1434, 0.0
    %v1457 = vsel %vm1451, %v1435, 0.0
    %v1458 = vsel %vm1452, %v1436, 0.0
    %v1459 = vsel %vm1451, %v1437, 0.0
    %v1460 = vsel %vm1452, %v1438, 0.0
    %v1461 = vsel %vm1451, %v1439, 0.0
    %v1462 = vsel %vm1452, %v1440, 0.0
    %v1463 = vsel %vm1451, %v1441, 0.0
    %v1464 = vsel %vm1452, %v1442, 0.0
    %v1465 = vsel %vm1451, %v1443, 0.0
    %v1466 = vsel %vm1452, %v1444, 0.0
    %v1467 = vsel %vm1451, %v1445, 0.0
    %v1468 = vsel %vm1452, %v1446, 0.0
    %v1469 = vmax.f32 %v1453, %v1454
    %v1470 = vrot.slane %v1469, 4
    %v1471 = vmax.f32 %v1469, %v1470
    %v1472 = vrot.slane %v1471, 2
    %v1473 = vmax.f32 %v1471, %v1472
    %v1474 = vrot.slane %v1473, 1
    %v1475 = vmax.f32 %v1473, %v1474
    %v1476 = vmax.f32 %v1455, %v1456
    %v1477 = vrot.slane %v1476, 4
    %v1478 = vmax.f32 %v1476, %v1477
    %v1479 = vrot.slane %v1478, 2
    %v1480 = vmax.f32 %v1478, %v1479
    %v1481 = vrot.slane %v1480, 1
    %v1482 = vmax.f32 %v1480, %v1481
    %v1483 = vmax.f32 %v1457, %v1458
    %v1484 = vrot.slane %v1483, 4
    %v1485 = vmax.f32 %v1483, %v1484
    %v1486 = vrot.slane %v1485, 2
    %v1487 = vmax.f32 %v1485, %v1486
    %v1488 = vrot.slane %v1487, 1
    %v1489 = vmax.f32 %v1487, %v1488
    %v1490 = vmax.f32 %v1459, %v1460
    %v1491 = vrot.slane %v1490, 4
    %v1492 = vmax.f32 %v1490, %v1491
    %v1493 = vrot.slane %v1492, 2
    %v1494 = vmax.f32 %v1492, %v1493
    %v1495 = vrot.slane %v1494, 1
    %v1496 = vmax.f32 %v1494, %v1495
    %v1497 = vmax.f32 %v1461, %v1462
    %v1498 = vrot.slane %v1497, 4
    %v1499 = vmax.f32 %v1497, %v1498
    %v1500 = vrot.slane %v1499, 2
    %v1501 = vmax.f32 %v1499, %v1500
    %v1502 = vrot.slane %v1501, 1
    %v1503 = vmax.f32 %v1501, %v1502
    %v1504 = vmax.f32 %v1463, %v1464
    %v1505 = vrot.slane %v1504, 4
    %v1506 = vmax.f32 %v1504, %v1505
    %v1507 = vrot.slane %v1506, 2
    %v1508 = vmax.f32 %v1506, %v1507
    %v1509 = vrot.slane %v1508, 1
    %v1510 = vmax.f32 %v1508, %v1509
    %v1511 = vmax.f32 %v1465, %v1466
    %v1512 = vrot.slane %v1511, 4
    %v1513 = vmax.f32 %v1511, %v1512
    %v1514 = vrot.slane %v1513, 2
    %v1515 = vmax.f32 %v1513, %v1514
    %v1516 = vrot.slane %v1515, 1
    %v1517 = vmax.f32 %v1515, %v1516
    %v1518 = vmax.f32 %v1467, %v1468
    %v1519 = vrot.slane %v1518, 4
    %v1520 = vmax.f32 %v1518, %v1519
    %v1521 = vrot.slane %v1520, 2
    %v1522 = vmax.f32 %v1520, %v1521
    %v1523 = vrot.slane %v1522, 1
    %v1524 = vmax.f32 %v1522, %v1523
    %vm1533 = vcmask 1041409
    %v1534 = vsel %vm1533, %v1482, %v1475
    %vm1535 = vcmask 1042434
    %v1536 = vsel %vm1535, %v1489, %v1534
    %vm1537 = vcmask 1043459
    %v1538 = vsel %vm1537, %v1496, %v1536
    %vm1539 = vcmask 1044484
    %v1540 = vsel %vm1539, %v1503, %v1538
    %vm1541 = vcmask 1045509
    %v1542 = vsel %vm1541, %v1510, %v1540
    %vm1543 = vcmask 1046534
    %v1544 = vsel %vm1543, %v1517, %v1542
    %vm1545 = vcmask 1047559
    %v1546 = vsel %vm1545, %v1524, %v1544
    %1548 = vst [vmem:[#allocation7] sm:$0xff] %v1546
    %v1549 = vmax.f32 %v1158, 0.0
    %v1550 = vmax.f32 %v1162, 0.0
    %v1551 = vmax.f32 %v1168, 0.0
    %v1552 = vmax.f32 %v1172, 0.0
    %v1553 = vmax.f32 %v1178, 0.0
    %v1554 = vmax.f32 %v1182, 0.0
    %v1555 = vmax.f32 %v1188, 0.0
    %v1556 = vmax.f32 %v1192, 0.0
    %v1557 = vmax.f32 %v1198, 0.0
    %v1558 = vmax.f32 %v1202, 0.0
    %v1559 = vmax.f32 %v1208, 0.0
    %v1560 = vmax.f32 %v1212, 0.0
    %v1561 = vmax.f32 %v1218, 0.0
    %v1562 = vmax.f32 %v1222, 0.0
    %v1563 = vmax.f32 %v1228, 0.0
    %v1564 = vmax.f32 %v1232, 0.0
    %vm1565 = vcmp.lt.s32.totalorder %v1429, 14
    %vm1566 = vcmp.lt.s32.totalorder %v1430, 14
    %v1567 = vsel %vm1565, 1, 0
    %v1568 = vsel %vm1566, 1, 0
    %vm1569 = vcmp.eq.s32.totalorder %v1567, 1
    %vm1570 = vcmp.eq.s32.totalorder %v1568, 1
    %v1571 = vsel %vm1569, %v1549, 0.0
    %v1572 = vsel %vm1570, %v1550, 0.0
    %v1573 = vsel %vm1569, %v1551, 0.0
    %v1574 = vsel %vm1570, %v1552, 0.0
    %v1575 = vsel %vm1569, %v1553, 0.0
    %v1576 = vsel %vm1570, %v1554, 0.0
    %v1577 = vsel %vm1569, %v1555, 0.0
    %v1578 = vsel %vm1570, %v1556, 0.0
    %v1579 = vsel %vm1569, %v1557, 0.0
    %v1580 = vsel %vm1570, %v1558, 0.0
    %v1581 = vsel %vm1569, %v1559, 0.0
    %v1582 = vsel %vm1570, %v1560, 0.0
    %v1583 = vsel %vm1569, %v1561, 0.0
    %v1584 = vsel %vm1570, %v1562, 0.0
    %v1585 = vsel %vm1569, %v1563, 0.0
    %v1586 = vsel %vm1570, %v1564, 0.0
    %v1587 = vmax.f32 %v1571, %v1572
    %v1588 = vrot.slane %v1587, 4
    %v1589 = vmax.f32 %v1587, %v1588
    %v1590 = vrot.slane %v1589, 2
    %v1591 = vmax.f32 %v1589, %v1590
    %v1592 = vrot.slane %v1591, 1
    %v1593 = vmax.f32 %v1591, %v1592
    %v1594 = vmax.f32 %v1573, %v1574
    %v1595 = vrot.slane %v1594, 4
    %v1596 = vmax.f32 %v1594, %v1595
    %v1597 = vrot.slane %v1596, 2
    %v1598 = vmax.f32 %v1596, %v1597
    %v1599 = vrot.slane %v1598, 1
    %v1600 = vmax.f32 %v1598, %v1599
    %v1601 = vmax.f32 %v1575, %v1576
    %v1602 = vrot.slane %v1601, 4
    %v1603 = vmax.f32 %v1601, %v1602
    %v1604 = vrot.slane %v1603, 2
    %v1605 = vmax.f32 %v1603, %v1604
    %v1606 = vrot.slane %v1605, 1
    %v1607 = vmax.f32 %v1605, %v1606
    %v1608 = vmax.f32 %v1577, %v1578
    %v1609 = vrot.slane %v1608, 4
    %v1610 = vmax.f32 %v1608, %v1609
    %v1611 = vrot.slane %v1610, 2
    %v1612 = vmax.f32 %v1610, %v1611
    %v1613 = vrot.slane %v1612, 1
    %v1614 = vmax.f32 %v1612, %v1613
    %v1615 = vmax.f32 %v1579, %v1580
    %v1616 = vrot.slane %v1615, 4
    %v1617 = vmax.f32 %v1615, %v1616
    %v1618 = vrot.slane %v1617, 2
    %v1619 = vmax.f32 %v1617, %v1618
    %v1620 = vrot.slane %v1619, 1
    %v1621 = vmax.f32 %v1619, %v1620
    %v1622 = vmax.f32 %v1581, %v1582
    %v1623 = vrot.slane %v1622, 4
    %v1624 = vmax.f32 %v1622, %v1623
    %v1625 = vrot.slane %v1624, 2
    %v1626 = vmax.f32 %v1624, %v1625
    %v1627 = vrot.slane %v1626, 1
    %v1628 = vmax.f32 %v1626, %v1627
    %v1629 = vmax.f32 %v1583, %v1584
    %v1630 = vrot.slane %v1629, 4
    %v1631 = vmax.f32 %v1629, %v1630
    %v1632 = vrot.slane %v1631, 2
    %v1633 = vmax.f32 %v1631, %v1632
    %v1634 = vrot.slane %v1633, 1
    %v1635 = vmax.f32 %v1633, %v1634
    %v1636 = vmax.f32 %v1585, %v1586
    %v1637 = vrot.slane %v1636, 4
    %v1638 = vmax.f32 %v1636, %v1637
    %v1639 = vrot.slane %v1638, 2
    %v1640 = vmax.f32 %v1638, %v1639
    %v1641 = vrot.slane %v1640, 1
    %v1642 = vmax.f32 %v1640, %v1641
    %v1651 = vsel %vm1533, %v1600, %v1593
    %v1652 = vsel %vm1535, %v1607, %v1651
    %v1653 = vsel %vm1537, %v1614, %v1652
    %v1654 = vsel %vm1539, %v1621, %v1653
    %v1655 = vsel %vm1541, %v1628, %v1654
    %v1656 = vsel %vm1543, %v1635, %v1655
    %v1657 = vsel %vm1545, %v1642, %v1656
    %1659 = vst [vmem:[#allocation7 + $0x8] sm:$0xff] %v1657
    %v1660 = vmax.f32 %v1366, 0.0
    %v1661 = vmax.f32 %v1369, 0.0
    %v1662 = vmax.f32 %v1374, 0.0
    %v1663 = vmax.f32 %v1377, 0.0
    %v1664 = vmax.f32 %v1382, 0.0
    %v1665 = vmax.f32 %v1385, 0.0
    %v1666 = vmax.f32 %v1390, 0.0
    %v1667 = vmax.f32 %v1393, 0.0
    %v1668 = vmax.f32 %v1398, 0.0
    %v1669 = vmax.f32 %v1401, 0.0
    %v1670 = vmax.f32 %v1406, 0.0
    %v1671 = vmax.f32 %v1409, 0.0
    %v1672 = vmax.f32 %v1414, 0.0
    %v1673 = vmax.f32 %v1417, 0.0
    %v1674 = vmax.f32 %v1422, 0.0
    %v1675 = vmax.f32 %v1425, 0.0
    %vm1676 = vcmp.lt.s32.totalorder %v1429, 13
    %vm1677 = vcmp.lt.s32.totalorder %v1430, 13
    %v1678 = vsel %vm1676, 1, 0
    %v1679 = vsel %vm1677, 1, 0
    %vm1680 = vcmp.eq.s32.totalorder %v1678, 1
    %vm1681 = vcmp.eq.s32.totalorder %v1679, 1
    %v1682 = vsel %vm1680, %v1660, 0.0
    %v1683 = vsel %vm1681, %v1661, 0.0
    %v1684 = vsel %vm1680, %v1662, 0.0
    %v1685 = vsel %vm1681, %v1663, 0.0
    %v1686 = vsel %vm1680, %v1664, 0.0
    %v1687 = vsel %vm1681, %v1665, 0.0
    %v1688 = vsel %vm1680, %v1666, 0.0
    %v1689 = vsel %vm1681, %v1667, 0.0
    %v1690 = vsel %vm1680, %v1668, 0.0
    %v1691 = vsel %vm1681, %v1669, 0.0
    %v1692 = vsel %vm1680, %v1670, 0.0
    %v1693 = vsel %vm1681, %v1671, 0.0
    %v1694 = vsel %vm1680, %v1672, 0.0
    %v1695 = vsel %vm1681, %v1673, 0.0
    %v1696 = vsel %vm1680, %v1674, 0.0
    %v1697 = vsel %vm1681, %v1675, 0.0
    %v1698 = vmax.f32 %v1682, %v1683
    %v1699 = vrot.slane %v1698, 4
    %v1700 = vmax.f32 %v1698, %v1699
    %v1701 = vrot.slane %v1700, 2
    %v1702 = vmax.f32 %v1700, %v1701
    %v1703 = vrot.slane %v1702, 1
    %v1704 = vmax.f32 %v1702, %v1703
    %v1705 = vmax.f32 %v1684, %v1685
    %v1706 = vrot.slane %v1705, 4
    %v1707 = vmax.f32 %v1705, %v1706
    %v1708 = vrot.slane %v1707, 2
    %v1709 = vmax.f32 %v1707, %v1708
    %v1710 = vrot.slane %v1709, 1
    %v1711 = vmax.f32 %v1709, %v1710
    %v1712 = vmax.f32 %v1686, %v1687
    %v1713 = vrot.slane %v1712, 4
    %v1714 = vmax.f32 %v1712, %v1713
    %v1715 = vrot.slane %v1714, 2
    %v1716 = vmax.f32 %v1714, %v1715
    %v1717 = vrot.slane %v1716, 1
    %v1718 = vmax.f32 %v1716, %v1717
    %v1719 = vmax.f32 %v1688, %v1689
    %v1720 = vrot.slane %v1719, 4
    %v1721 = vmax.f32 %v1719, %v1720
    %v1722 = vrot.slane %v1721, 2
    %v1723 = vmax.f32 %v1721, %v1722
    %v1724 = vrot.slane %v1723, 1
    %v1725 = vmax.f32 %v1723, %v1724
    %v1726 = vmax.f32 %v1690, %v1691
    %v1727 = vrot.slane %v1726, 4
    %v1728 = vmax.f32 %v1726, %v1727
    %v1729 = vrot.slane %v1728, 2
    %v1730 = vmax.f32 %v1728, %v1729
    %v1731 = vrot.slane %v1730, 1
    %v1732 = vmax.f32 %v1730, %v1731
    %v1733 = vmax.f32 %v1692, %v1693
    %v1734 = vrot.slane %v1733, 4
    %v1735 = vmax.f32 %v1733, %v1734
    %v1736 = vrot.slane %v1735, 2
    %v1737 = vmax.f32 %v1735, %v1736
    %v1738 = vrot.slane %v1737, 1
    %v1739 = vmax.f32 %v1737, %v1738
    %v1740 = vmax.f32 %v1694, %v1695
    %v1741 = vrot.slane %v1740, 4
    %v1742 = vmax.f32 %v1740, %v1741
    %v1743 = vrot.slane %v1742, 2
    %v1744 = vmax.f32 %v1742, %v1743
    %v1745 = vrot.slane %v1744, 1
    %v1746 = vmax.f32 %v1744, %v1745
    %v1747 = vmax.f32 %v1696, %v1697
    %v1748 = vrot.slane %v1747, 4
    %v1749 = vmax.f32 %v1747, %v1748
    %v1750 = vrot.slane %v1749, 2
    %v1751 = vmax.f32 %v1749, %v1750
    %v1752 = vrot.slane %v1751, 1
    %v1753 = vmax.f32 %v1751, %v1752
    %v1762 = vsel %vm1533, %v1711, %v1704
    %v1763 = vsel %vm1535, %v1718, %v1762
    %v1764 = vsel %vm1537, %v1725, %v1763
    %v1765 = vsel %vm1539, %v1732, %v1764
    %v1766 = vsel %vm1541, %v1739, %v1765
    %v1767 = vsel %vm1543, %v1746, %v1766
    %v1768 = vsel %vm1545, %v1753, %v1767
    %1770 = vst [vmem:[#allocation7 + $0x10] sm:$0xff] %v1768
    // Predicated region
    $region18: #{tpu_custom_call.1} parent=1 // pred_check
      _
    $region19: #{tpu_custom_call.1} parent=1 // pred_check_branch
      %1772 = sbr.rel (0) target = $region21
    $region20: #{tpu_custom_call.1} parent=1 // pred_region
      %s1774 = ssub.s32 384, 384
      %1775 = vsyncadd [#allocation4], %s1774
      %s1777 = sshll.u32 [#allocation7], 4
      %s1778 = int_to_ptr.vmem [resolvable:$true] %s1777
      %1780 = dma.vmem_to_hbm [thread:$0]  %s1778, 384, %s2, [#allocation4]
    $region21: #{tpu_custom_call.1} parent=1 // pred_fallthru
      _
    // Predicated region
    $region22: #{tpu_custom_call.1} parent=1 // pred_check
      _
    $region23: #{tpu_custom_call.1} parent=1 // pred_check_branch
      %1782 = sbr.rel (0) target = $region25
    $region24: #{tpu_custom_call.1} parent=1 // pred_region
      %1783 = dma.done [#allocation4], 384
    $region25: #{tpu_custom_call.1} parent=1 // pred_fallthru
      _
    %1784 = vsyncpa [#allocation3], 1
    %1785 = vsyncpa [#allocation6], 1
    %1786 = vsyncpa [#allocation4], 1

</llo_original>
